<compile_context>
chip_gen: v6e
topology: v6e:2x2x1
jax: 0.10.0
libtpu: 0.0.40
codegen_flags: <defaults>
</compile_context>

<pallas_src>
import functools

import jax
import jax.numpy as jnp
from jax.experimental import pallas as pl
from jax.experimental.pallas import tpu as pltpu

# ----------------------------- config (small, deterministic) -----------------------------
B = 8            # batch size
IN = 128         # input_size (== HID so the residual chain and fused weights stack uniformly)
HID = 128        # hidden_size
OUT = 256        # output_size
LAYERS = 3       # num_layers


# ----------------------------- kernel ----------------------------------------------------
def stacked_lstm_kernel(x_ref, h0_ref, c0_ref, wcat_ref, b_ref, who_ref, bo_ref,
                        h1_ref, c1_ref, out_ref, xh_ref, *, n_layers, hid, in_size):
    """One StackedLSTM.forward step.

    x_ref:   [B, IN]          f32
    h0/c0:   [B, L, H]        f32   (PyTorch layout; aliased in HBM with h1/c1)
    wcat:    [L, IN+H, 4H]    bf16  (concat of W_ih^T and W_hh^T -> one fused gate matmul)
    b:       [L, 1, 4H]       f32   (b_ih + b_hh fused)
    who:     [H, OUT]         bf16,  bo: [1, OUT] f32
    outputs: h1/c1 [B, L, H] f32, out [B, OUT] f32
    xh_ref:  [B, IN+H]        f32 scratch holding concat(input, h_l) persistently
    """
    xh_ref[:, :in_size] = x_ref[...]
    for l in range(n_layers):                                     # static unroll, L small
        h_l = h0_ref[:, l, :]                                     # [B, H]
        c_l = c0_ref[:, l, :]                                     # [B, H]
        xh_ref[:, in_size:] = h_l                                 # build concat in scratch
        # fused i2h + h2h gate matmul: one K=IN+H bf16 MXU issue per layer, f32 accumulate
        gates = (jnp.dot(xh_ref[...].astype(jnp.bfloat16), wcat_ref[l],
                         preferred_element_type=jnp.float32)
                 + b_ref[l])                                      # [B, 4H], gate order i,f,g,o
        i_g = jax.nn.sigmoid(gates[:, 0 * hid:1 * hid])
        f_g = jax.nn.sigmoid(gates[:, 1 * hid:2 * hid])
        g_g = jnp.tanh(gates[:, 2 * hid:3 * hid])
        o_g = jax.nn.sigmoid(gates[:, 3 * hid:4 * hid])
        c_new = f_g * c_l + i_g * g_g
        h_new = o_g * jnp.tanh(c_new)
        h1_ref[:, l, :] = h_new
        c1_ref[:, l, :] = c_new
        # residual inter-layer wiring; dropout is identity at inference
        if l == 0:
            xh_ref[:, :in_size] = h_new
        else:
            xh_ref[:, :in_size] = xh_ref[:, :in_size] + h_new
    # TODO(synk): training-mode nn.Dropout masking and the layer_norm=True branch
    #             (cell LayerNorm + h2o_norm) are not implemented (eval semantics only).
    inp = xh_ref[:, :in_size]                                     # residual-accumulated sum
    out_ref[...] = (jnp.dot(inp.astype(jnp.bfloat16), who_ref[...],
                            preferred_element_type=jnp.float32)
                    + bo_ref[...])                                # [B, OUT], lane-dense


# ----------------------------- wrapper ----------------------------------------------------
_VMEM = pl.BlockSpec(memory_space=pltpu.MemorySpace.VMEM)


def fuse_params(params):
    """PyTorch-layout weights -> fused kernel layout.  Call ONCE at model init (outside the
    per-step jitted path); re-derive whenever params change, otherwise weights go stale."""
    wcat = jnp.stack(
        [jnp.concatenate([params["w_ih"][l].T, params["w_hh"][l].T], axis=0)
         for l in range(LAYERS)], axis=0).astype(jnp.bfloat16)    # [L, IN+H, 4H] bf16
    b = (params["b_ih"] + params["b_hh"])[:, None, :].astype(jnp.float32)   # [L, 1, 4H]
    who = params["w_ho"].T.astype(jnp.bfloat16)                   # [H, OUT] bf16
    bo = params["b_o"][None, :].astype(jnp.float32)               # [1, OUT]
    return wcat, b, who, bo


@functools.partial(jax.jit, donate_argnums=(1, 2))
def stacked_lstm_forward(x, hidden, cell, wcat, b, who, bo):
    """x: [B, IN]; hidden/cell: [B, L, H] (PyTorch layout, donated -> updated in place).
    Returns (h1 [B, L, H], c1 [B, L, H], output [B, OUT])."""
    bsz, in_size = x.shape
    n_layers, hid = hidden.shape[1], hidden.shape[2]
    out_dim = who.shape[1]
    kernel = functools.partial(stacked_lstm_kernel,
                               n_layers=n_layers, hid=hid, in_size=in_size)
    h1, c1, out = pl.pallas_call(
        kernel,
        out_shape=(
            jax.ShapeDtypeStruct((bsz, n_layers, hid), jnp.float32),
            jax.ShapeDtypeStruct((bsz, n_layers, hid), jnp.float32),
            jax.ShapeDtypeStruct((bsz, out_dim), jnp.float32),
        ),
        in_specs=[_VMEM] * 7,
        out_specs=(_VMEM, _VMEM, _VMEM),
        scratch_shapes=[pltpu.VMEM((bsz, in_size + hid), jnp.float32)],
        input_output_aliases={1: 0, 2: 1},        # h0 -> h1, c0 -> c1 (in-place state)
    )(x, hidden, cell, wcat, b, who, bo)
    return h1, c1, out


# ----------------------------- pure-JAX reference (PyTorch math) ---------------------------
def stacked_lstm_reference(x, hidden, cell, params, bf16_matmul=False):
    """Unfused reference of the spec.  bf16_matmul=True mimics the kernel's MXU precision
    (bf16 operands, f32 accumulation) for a tight numerical check."""
    def mm(a, w):                                  # a @ w.T
        if bf16_matmul:
            return jnp.dot(a.astype(jnp.bfloat16), w.T.astype(jnp.bfloat16),
                           preferred_element_type=jnp.float32)
        return jnp.dot(a, w.T, preferred_element_type=jnp.float32)

    inp = x
    h1, c1 = [], []
    for l in range(LAYERS):
        h_l = hidden[:, l, :]
        c_l = cell[:, l, :]
        gates = (mm(inp, params["w_ih"][l]) + params["b_ih"][l]
                 + mm(h_l, params["w_hh"][l]) + params["b_hh"][l])
        i_g = jax.nn.sigmoid(gates[:, 0 * HID:1 * HID])
        f_g = jax.nn.sigmoid(gates[:, 1 * HID:2 * HID])
        g_g = jnp.tanh(gates[:, 2 * HID:3 * HID])
        o_g = jax.nn.sigmoid(gates[:, 3 * HID:4 * HID])
        c_new = f_g * c_l + i_g * g_g
        h_new = o_g * jnp.tanh(c_new)
        inp = h_new if l == 0 else inp + h_new     # dropout = identity (eval)
        h1.append(h_new)
        c1.append(c_new)
    out = mm(inp, params["w_ho"]) + params["b_o"]
    return jnp.stack(h1, axis=1), jnp.stack(c1, axis=1), out


# ----------------------------- main --------------------------------------------------------
if __name__ == "__main__":
    key = jax.random.PRNGKey(0)
    ks = jax.random.split(key, 9)
    scale = 0.1
    params = dict(                                                 # PyTorch-layout weights
        w_ih=scale * jax.random.normal(ks[0], (LAYERS, 4 * HID, IN), jnp.float32),
        w_hh=scale * jax.random.normal(ks[1], (LAYERS, 4 * HID, HID), jnp.float32),
        b_ih=scale * jax.random.normal(ks[2], (LAYERS, 4 * HID), jnp.float32),
        b_hh=scale * jax.random.normal(ks[3], (LAYERS, 4 * HID), jnp.float32),
        w_ho=scale * jax.random.normal(ks[4], (OUT, HID), jnp.float32),
        b_o=scale * jax.random.normal(ks[5], (OUT,), jnp.float32),
    )
    x = jax.random.normal(ks[6], (B, IN), jnp.float32)
    hidden = jax.random.normal(ks[7], (B, LAYERS, HID), jnp.float32)
    cell = jax.random.normal(ks[8], (B, LAYERS, HID), jnp.float32)

    # fused/bf16 weights built ONCE, outside the jitted per-step path
    wcat, b, who, bo = fuse_params(params)

    # references computed BEFORE the kernel call (hidden/cell are donated to the kernel)
    h1_r32, c1_r32, out_r32 = stacked_lstm_reference(x, hidden, cell, params,
                                                     bf16_matmul=False)
    h1_rbf, c1_rbf, out_rbf = stacked_lstm_reference(x, hidden, cell, params,
                                                     bf16_matmul=True)
    jax.block_until_ready((h1_r32, h1_rbf))

    h1, c1, out = stacked_lstm_forward(x, hidden, cell, wcat, b, who, bo)
    jax.block_until_ready((h1, c1, out))

    # shape + correctness checks
    assert h1.shape == (B, LAYERS, HID)
    assert c1.shape == (B, LAYERS, HID)
    assert out.shape == (B, OUT)
    for got in (h1, c1, out):
        assert bool(jnp.all(jnp.isfinite(got)))
    # tight check vs. a reference using the same bf16-operand / f32-accumulate matmuls
    for got, ref in ((h1, h1_rbf), (c1, c1_rbf), (out, out_rbf)):
        assert bool(jnp.max(jnp.abs(got - ref)) < 2e-3), "kernel deviates from bf16 reference"
    # loose sanity band vs. the full-f32 PyTorch-math reference (bf16 weight rounding)
    for got, ref in ((h1, h1_r32), (c1, c1_r32), (out, out_r32)):
        assert bool(jnp.max(jnp.abs(got - ref)) < 1e-1), "kernel deviates from f32 reference"

    print("KERNEL_OK")
</pallas_src>

<mosaic_0001>
module attributes {stable_mosaic.version = 11 : i64} {
  func.func @stacked_lstm_kernel(%arg0: memref<8x128xf32, #tpu.memory_space<vmem>>, %arg1: memref<8x3x128xf32, #tpu.memory_space<vmem>>, %arg2: memref<8x3x128xf32, #tpu.memory_space<vmem>>, %arg3: memref<3x256x512xbf16, #tpu.memory_space<vmem>>, %arg4: memref<3x1x512xf32, #tpu.memory_space<vmem>>, %arg5: memref<128x256xbf16, #tpu.memory_space<vmem>>, %arg6: memref<1x256xf32, #tpu.memory_space<vmem>>, %arg7: memref<8x3x128xf32, #tpu.memory_space<vmem>>, %arg8: memref<8x3x128xf32, #tpu.memory_space<vmem>>, %arg9: memref<8x256xf32, #tpu.memory_space<vmem>>, %arg10: memref<8x256xf32, #tpu.memory_space<vmem>>) attributes {dimension_semantics = [], scalar_prefetch = 0 : i64, scratch_operands = 1 : i64, tpu.core_type = #tpu.core_type<tc>} {
    %c0 = arith.constant 0 : index
    %c0_0 = arith.constant 0 : index
    %0 = vector.load %arg0[%c0, %c0_0] : memref<8x128xf32, #tpu.memory_space<vmem>>, vector<8x128xf32>
    %c0_1 = arith.constant 0 : index
    %c0_2 = arith.constant 0 : index
    %1 = vector.load %arg10[%c0_1, %c0_2] : memref<8x256xf32, #tpu.memory_space<vmem>>, vector<8x128xf32>
    tpu.vector_store %arg10[%c0_1, %c0_2], %0 {strides = array<i32>} : memref<8x256xf32, #tpu.memory_space<vmem>>, vector<8x128xf32>,
    %c0_3 = arith.constant 0 : index
    %c0_4 = arith.constant 0 : index
    %c0_5 = arith.constant 0 : index
    %2 = vector.load %arg1[%c0_3, %c0_4, %c0_5] : memref<8x3x128xf32, #tpu.memory_space<vmem>>, vector<8x1x128xf32>
    %3 = vector.shape_cast %2 : vector<8x1x128xf32> to vector<8x128xf32>
    %c0_6 = arith.constant 0 : index
    %c0_7 = arith.constant 0 : index
    %c0_8 = arith.constant 0 : index
    %4 = vector.load %arg2[%c0_6, %c0_7, %c0_8] : memref<8x3x128xf32, #tpu.memory_space<vmem>>, vector<8x1x128xf32>
    %5 = vector.shape_cast %4 : vector<8x1x128xf32> to vector<8x128xf32>
    %c0_9 = arith.constant 0 : index
    %c128 = arith.constant 128 : index
    %6 = vector.load %arg10[%c0_9, %c128] : memref<8x256xf32, #tpu.memory_space<vmem>>, vector<8x128xf32>
    tpu.vector_store %arg10[%c0_9, %c128], %3 {strides = array<i32>} : memref<8x256xf32, #tpu.memory_space<vmem>>, vector<8x128xf32>,
    %c0_10 = arith.constant 0 : index
    %c0_11 = arith.constant 0 : index
    %7 = vector.load %arg10[%c0_10, %c0_11] : memref<8x256xf32, #tpu.memory_space<vmem>>, vector<8x256xf32>
    %8 = arith.truncf %7 : vector<8x256xf32> to vector<8x256xbf16>
    %c0_12 = arith.constant 0 : index
    %c0_13 = arith.constant 0 : index
    %c0_14 = arith.constant 0 : index
    %9 = vector.load %arg3[%c0_12, %c0_13, %c0_14] : memref<3x256x512xbf16, #tpu.memory_space<vmem>>, vector<1x256x512xbf16>
    %10 = vector.shape_cast %9 : vector<1x256x512xbf16> to vector<256x512xbf16>
    %cst = arith.constant dense<0.000000e+00> : vector<8x512xf32>
    %11 = tpu.matmul %8, %10, %cst {dimension_numbers = #tpu.dot_dimension_numbers<[1], [0], [0], [1], [0, 0, 1, 1], [], []>} : vector<8x256xbf16>, vector<256x512xbf16>, vector<8x512xf32> -> vector<8x512xf32>
    %c0_15 = arith.constant 0 : index
    %c0_16 = arith.constant 0 : index
    %c0_17 = arith.constant 0 : index
    %12 = vector.load %arg4[%c0_15, %c0_16, %c0_17] : memref<3x1x512xf32, #tpu.memory_space<vmem>>, vector<1x1x512xf32>
    %13 = vector.shape_cast %12 : vector<1x1x512xf32> to vector<1x512xf32>
    %14 = vector.broadcast %13 : vector<1x512xf32> to vector<8x512xf32>
    %15 = arith.addf %11, %14 : vector<8x512xf32>
    %16 = vector.extract_strided_slice %15 {offsets = [0, 0], sizes = [8, 128], strides = [1, 1]} : vector<8x512xf32> to vector<8x128xf32>
    %17 = arith.negf %16 : vector<8x128xf32>
    %18 = math.exp %17 : vector<8x128xf32>
    %cst_18 = arith.constant 1.000000e+00 : f32
    %19 = vector.broadcast %cst_18 : f32 to vector<8x128xf32>
    %20 = arith.addf %19, %18 : vector<8x128xf32>
    %21 = arith.divf %19, %20 : vector<8x128xf32>
    %22 = vector.extract_strided_slice %15 {offsets = [0, 128], sizes = [8, 128], strides = [1, 1]} : vector<8x512xf32> to vector<8x128xf32>
    %23 = arith.negf %22 : vector<8x128xf32>
    %24 = math.exp %23 : vector<8x128xf32>
    %cst_19 = arith.constant 1.000000e+00 : f32
    %25 = vector.broadcast %cst_19 : f32 to vector<8x128xf32>
    %26 = arith.addf %25, %24 : vector<8x128xf32>
    %27 = arith.divf %25, %26 : vector<8x128xf32>
    %28 = vector.extract_strided_slice %15 {offsets = [0, 256], sizes = [8, 128], strides = [1, 1]} : vector<8x512xf32> to vector<8x128xf32>
    %29 = math.tanh %28 : vector<8x128xf32>
    %30 = vector.extract_strided_slice %15 {offsets = [0, 384], sizes = [8, 128], strides = [1, 1]} : vector<8x512xf32> to vector<8x128xf32>
    %31 = arith.negf %30 : vector<8x128xf32>
    %32 = math.exp %31 : vector<8x128xf32>
    %cst_20 = arith.constant 1.000000e+00 : f32
    %33 = vector.broadcast %cst_20 : f32 to vector<8x128xf32>
    %34 = arith.addf %33, %32 : vector<8x128xf32>
    %35 = arith.divf %33, %34 : vector<8x128xf32>
    %36 = arith.mulf %27, %5 : vector<8x128xf32>
    %37 = arith.mulf %21, %29 : vector<8x128xf32>
    %38 = arith.addf %36, %37 : vector<8x128xf32>
    %39 = math.tanh %38 : vector<8x128xf32>
    %40 = arith.mulf %35, %39 : vector<8x128xf32>
    %c0_21 = arith.constant 0 : index
    %c0_22 = arith.constant 0 : index
    %c0_23 = arith.constant 0 : index
    %41 = vector.load %arg7[%c0_21, %c0_22, %c0_23] : memref<8x3x128xf32, #tpu.memory_space<vmem>>, vector<8x1x128xf32>
    %42 = vector.shape_cast %41 : vector<8x1x128xf32> to vector<8x128xf32>
    %43 = vector.shape_cast %40 : vector<8x128xf32> to vector<8x1x128xf32>
    tpu.vector_store %arg7[%c0_21, %c0_22, %c0_23], %43 {strides = array<i32>} : memref<8x3x128xf32, #tpu.memory_space<vmem>>, vector<8x1x128xf32>,
    %c0_24 = arith.constant 0 : index
    %c0_25 = arith.constant 0 : index
    %c0_26 = arith.constant 0 : index
    %44 = vector.load %arg8[%c0_24, %c0_25, %c0_26] : memref<8x3x128xf32, #tpu.memory_space<vmem>>, vector<8x1x128xf32>
    %45 = vector.shape_cast %44 : vector<8x1x128xf32> to vector<8x128xf32>
    %46 = vector.shape_cast %38 : vector<8x128xf32> to vector<8x1x128xf32>
    tpu.vector_store %arg8[%c0_24, %c0_25, %c0_26], %46 {strides = array<i32>} : memref<8x3x128xf32, #tpu.memory_space<vmem>>, vector<8x1x128xf32>,
    %c0_27 = arith.constant 0 : index
    %c0_28 = arith.constant 0 : index
    %47 = vector.load %arg10[%c0_27, %c0_28] : memref<8x256xf32, #tpu.memory_space<vmem>>, vector<8x128xf32>
    tpu.vector_store %arg10[%c0_27, %c0_28], %40 {strides = array<i32>} : memref<8x256xf32, #tpu.memory_space<vmem>>, vector<8x128xf32>,
    %c0_29 = arith.constant 0 : index
    %c1 = arith.constant 1 : index
    %c0_30 = arith.constant 0 : index
    %48 = vector.load %arg1[%c0_29, %c1, %c0_30] : memref<8x3x128xf32, #tpu.memory_space<vmem>>, vector<8x1x128xf32>
    %49 = vector.shape_cast %48 : vector<8x1x128xf32> to vector<8x128xf32>
    %c0_31 = arith.constant 0 : index
    %c1_32 = arith.constant 1 : index
    %c0_33 = arith.constant 0 : index
    %50 = vector.load %arg2[%c0_31, %c1_32, %c0_33] : memref<8x3x128xf32, #tpu.memory_space<vmem>>, vector<8x1x128xf32>
    %51 = vector.shape_cast %50 : vector<8x1x128xf32> to vector<8x128xf32>
    %c0_34 = arith.constant 0 : index
    %c128_35 = arith.constant 128 : index
    %52 = vector.load %arg10[%c0_34, %c128_35] : memref<8x256xf32, #tpu.memory_space<vmem>>, vector<8x128xf32>
    tpu.vector_store %arg10[%c0_34, %c128_35], %49 {strides = array<i32>} : memref<8x256xf32, #tpu.memory_space<vmem>>, vector<8x128xf32>,
    %c0_36 = arith.constant 0 : index
    %c0_37 = arith.constant 0 : index
    %53 = vector.load %arg10[%c0_36, %c0_37] : memref<8x256xf32, #tpu.memory_space<vmem>>, vector<8x256xf32>
    %54 = arith.truncf %53 : vector<8x256xf32> to vector<8x256xbf16>
    %c1_38 = arith.constant 1 : index
    %c0_39 = arith.constant 0 : index
    %c0_40 = arith.constant 0 : index
    %55 = vector.load %arg3[%c1_38, %c0_39, %c0_40] : memref<3x256x512xbf16, #tpu.memory_space<vmem>>, vector<1x256x512xbf16>
    %56 = vector.shape_cast %55 : vector<1x256x512xbf16> to vector<256x512xbf16>
    %cst_41 = arith.constant dense<0.000000e+00> : vector<8x512xf32>
    %57 = tpu.matmul %54, %56, %cst_41 {dimension_numbers = #tpu.dot_dimension_numbers<[1], [0], [0], [1], [0, 0, 1, 1], [], []>} : vector<8x256xbf16>, vector<256x512xbf16>, vector<8x512xf32> -> vector<8x512xf32>
    %c1_42 = arith.constant 1 : index
    %c0_43 = arith.constant 0 : index
    %c0_44 = arith.constant 0 : index
    %58 = vector.load %arg4[%c1_42, %c0_43, %c0_44] : memref<3x1x512xf32, #tpu.memory_space<vmem>>, vector<1x1x512xf32>
    %59 = vector.shape_cast %58 : vector<1x1x512xf32> to vector<1x512xf32>
    %60 = vector.broadcast %59 : vector<1x512xf32> to vector<8x512xf32>
    %61 = arith.addf %57, %60 : vector<8x512xf32>
    %62 = vector.extract_strided_slice %61 {offsets = [0, 0], sizes = [8, 128], strides = [1, 1]} : vector<8x512xf32> to vector<8x128xf32>
    %63 = arith.negf %62 : vector<8x128xf32>
    %64 = math.exp %63 : vector<8x128xf32>
    %cst_45 = arith.constant 1.000000e+00 : f32
    %65 = vector.broadcast %cst_45 : f32 to vector<8x128xf32>
    %66 = arith.addf %65, %64 : vector<8x128xf32>
    %67 = arith.divf %65, %66 : vector<8x128xf32>
    %68 = vector.extract_strided_slice %61 {offsets = [0, 128], sizes = [8, 128], strides = [1, 1]} : vector<8x512xf32> to vector<8x128xf32>
    %69 = arith.negf %68 : vector<8x128xf32>
    %70 = math.exp %69 : vector<8x128xf32>
    %cst_46 = arith.constant 1.000000e+00 : f32
    %71 = vector.broadcast %cst_46 : f32 to vector<8x128xf32>
    %72 = arith.addf %71, %70 : vector<8x128xf32>
    %73 = arith.divf %71, %72 : vector<8x128xf32>
    %74 = vector.extract_strided_slice %61 {offsets = [0, 256], sizes = [8, 128], strides = [1, 1]} : vector<8x512xf32> to vector<8x128xf32>
    %75 = math.tanh %74 : vector<8x128xf32>
    %76 = vector.extract_strided_slice %61 {offsets = [0, 384], sizes = [8, 128], strides = [1, 1]} : vector<8x512xf32> to vector<8x128xf32>
    %77 = arith.negf %76 : vector<8x128xf32>
    %78 = math.exp %77 : vector<8x128xf32>
    %cst_47 = arith.constant 1.000000e+00 : f32
    %79 = vector.broadcast %cst_47 : f32 to vector<8x128xf32>
    %80 = arith.addf %79, %78 : vector<8x128xf32>
    %81 = arith.divf %79, %80 : vector<8x128xf32>
    %82 = arith.mulf %73, %51 : vector<8x128xf32>
    %83 = arith.mulf %67, %75 : vector<8x128xf32>
    %84 = arith.addf %82, %83 : vector<8x128xf32>
    %85 = math.tanh %84 : vector<8x128xf32>
    %86 = arith.mulf %81, %85 : vector<8x128xf32>
    %c0_48 = arith.constant 0 : index
    %c1_49 = arith.constant 1 : index
    %c0_50 = arith.constant 0 : index
    %87 = vector.load %arg7[%c0_48, %c1_49, %c0_50] : memref<8x3x128xf32, #tpu.memory_space<vmem>>, vector<8x1x128xf32>
    %88 = vector.shape_cast %87 : vector<8x1x128xf32> to vector<8x128xf32>
    %89 = vector.shape_cast %86 : vector<8x128xf32> to vector<8x1x128xf32>
    tpu.vector_store %arg7[%c0_48, %c1_49, %c0_50], %89 {strides = array<i32>} : memref<8x3x128xf32, #tpu.memory_space<vmem>>, vector<8x1x128xf32>,
    %c0_51 = arith.constant 0 : index
    %c1_52 = arith.constant 1 : index
    %c0_53 = arith.constant 0 : index
    %90 = vector.load %arg8[%c0_51, %c1_52, %c0_53] : memref<8x3x128xf32, #tpu.memory_space<vmem>>, vector<8x1x128xf32>
    %91 = vector.shape_cast %90 : vector<8x1x128xf32> to vector<8x128xf32>
    %92 = vector.shape_cast %84 : vector<8x128xf32> to vector<8x1x128xf32>
    tpu.vector_store %arg8[%c0_51, %c1_52, %c0_53], %92 {strides = array<i32>} : memref<8x3x128xf32, #tpu.memory_space<vmem>>, vector<8x1x128xf32>,
    %c0_54 = arith.constant 0 : index
    %c0_55 = arith.constant 0 : index
    %93 = vector.load %arg10[%c0_54, %c0_55] : memref<8x256xf32, #tpu.memory_space<vmem>>, vector<8x128xf32>
    %94 = arith.addf %93, %86 : vector<8x128xf32>
    %c0_56 = arith.constant 0 : index
    %c0_57 = arith.constant 0 : index
    %95 = vector.load %arg10[%c0_56, %c0_57] : memref<8x256xf32, #tpu.memory_space<vmem>>, vector<8x128xf32>
    tpu.vector_store %arg10[%c0_56, %c0_57], %94 {strides = array<i32>} : memref<8x256xf32, #tpu.memory_space<vmem>>, vector<8x128xf32>,
    %c0_58 = arith.constant 0 : index
    %c2 = arith.constant 2 : index
    %c0_59 = arith.constant 0 : index
    %96 = vector.load %arg1[%c0_58, %c2, %c0_59] : memref<8x3x128xf32, #tpu.memory_space<vmem>>, vector<8x1x128xf32>
    %97 = vector.shape_cast %96 : vector<8x1x128xf32> to vector<8x128xf32>
    %c0_60 = arith.constant 0 : index
    %c2_61 = arith.constant 2 : index
    %c0_62 = arith.constant 0 : index
    %98 = vector.load %arg2[%c0_60, %c2_61, %c0_62] : memref<8x3x128xf32, #tpu.memory_space<vmem>>, vector<8x1x128xf32>
    %99 = vector.shape_cast %98 : vector<8x1x128xf32> to vector<8x128xf32>
    %c0_63 = arith.constant 0 : index
    %c128_64 = arith.constant 128 : index
    %100 = vector.load %arg10[%c0_63, %c128_64] : memref<8x256xf32, #tpu.memory_space<vmem>>, vector<8x128xf32>
    tpu.vector_store %arg10[%c0_63, %c128_64], %97 {strides = array<i32>} : memref<8x256xf32, #tpu.memory_space<vmem>>, vector<8x128xf32>,
    %c0_65 = arith.constant 0 : index
    %c0_66 = arith.constant 0 : index
    %101 = vector.load %arg10[%c0_65, %c0_66] : memref<8x256xf32, #tpu.memory_space<vmem>>, vector<8x256xf32>
    %102 = arith.truncf %101 : vector<8x256xf32> to vector<8x256xbf16>
    %c2_67 = arith.constant 2 : index
    %c0_68 = arith.constant 0 : index
    %c0_69 = arith.constant 0 : index
    %103 = vector.load %arg3[%c2_67, %c0_68, %c0_69] : memref<3x256x512xbf16, #tpu.memory_space<vmem>>, vector<1x256x512xbf16>
    %104 = vector.shape_cast %103 : vector<1x256x512xbf16> to vector<256x512xbf16>
    %cst_70 = arith.constant dense<0.000000e+00> : vector<8x512xf32>
    %105 = tpu.matmul %102, %104, %cst_70 {dimension_numbers = #tpu.dot_dimension_numbers<[1], [0], [0], [1], [0, 0, 1, 1], [], []>} : vector<8x256xbf16>, vector<256x512xbf16>, vector<8x512xf32> -> vector<8x512xf32>
    %c2_71 = arith.constant 2 : index
    %c0_72 = arith.constant 0 : index
    %c0_73 = arith.constant 0 : index
    %106 = vector.load %arg4[%c2_71, %c0_72, %c0_73] : memref<3x1x512xf32, #tpu.memory_space<vmem>>, vector<1x1x512xf32>
    %107 = vector.shape_cast %106 : vector<1x1x512xf32> to vector<1x512xf32>
    %108 = vector.broadcast %107 : vector<1x512xf32> to vector<8x512xf32>
    %109 = arith.addf %105, %108 : vector<8x512xf32>
    %110 = vector.extract_strided_slice %109 {offsets = [0, 0], sizes = [8, 128], strides = [1, 1]} : vector<8x512xf32> to vector<8x128xf32>
    %111 = arith.negf %110 : vector<8x128xf32>
    %112 = math.exp %111 : vector<8x128xf32>
    %cst_74 = arith.constant 1.000000e+00 : f32
    %113 = vector.broadcast %cst_74 : f32 to vector<8x128xf32>
    %114 = arith.addf %113, %112 : vector<8x128xf32>
    %115 = arith.divf %113, %114 : vector<8x128xf32>
    %116 = vector.extract_strided_slice %109 {offsets = [0, 128], sizes = [8, 128], strides = [1, 1]} : vector<8x512xf32> to vector<8x128xf32>
    %117 = arith.negf %116 : vector<8x128xf32>
    %118 = math.exp %117 : vector<8x128xf32>
    %cst_75 = arith.constant 1.000000e+00 : f32
    %119 = vector.broadcast %cst_75 : f32 to vector<8x128xf32>
    %120 = arith.addf %119, %118 : vector<8x128xf32>
    %121 = arith.divf %119, %120 : vector<8x128xf32>
    %122 = vector.extract_strided_slice %109 {offsets = [0, 256], sizes = [8, 128], strides = [1, 1]} : vector<8x512xf32> to vector<8x128xf32>
    %123 = math.tanh %122 : vector<8x128xf32>
    %124 = vector.extract_strided_slice %109 {offsets = [0, 384], sizes = [8, 128], strides = [1, 1]} : vector<8x512xf32> to vector<8x128xf32>
    %125 = arith.negf %124 : vector<8x128xf32>
    %126 = math.exp %125 : vector<8x128xf32>
    %cst_76 = arith.constant 1.000000e+00 : f32
    %127 = vector.broadcast %cst_76 : f32 to vector<8x128xf32>
    %128 = arith.addf %127, %126 : vector<8x128xf32>
    %129 = arith.divf %127, %128 : vector<8x128xf32>
    %130 = arith.mulf %121, %99 : vector<8x128xf32>
    %131 = arith.mulf %115, %123 : vector<8x128xf32>
    %132 = arith.addf %130, %131 : vector<8x128xf32>
    %133 = math.tanh %132 : vector<8x128xf32>
    %134 = arith.mulf %129, %133 : vector<8x128xf32>
    %c0_77 = arith.constant 0 : index
    %c2_78 = arith.constant 2 : index
    %c0_79 = arith.constant 0 : index
    %135 = vector.load %arg7[%c0_77, %c2_78, %c0_79] : memref<8x3x128xf32, #tpu.memory_space<vmem>>, vector<8x1x128xf32>
    %136 = vector.shape_cast %135 : vector<8x1x128xf32> to vector<8x128xf32>
    %137 = vector.shape_cast %134 : vector<8x128xf32> to vector<8x1x128xf32>
    tpu.vector_store %arg7[%c0_77, %c2_78, %c0_79], %137 {strides = array<i32>} : memref<8x3x128xf32, #tpu.memory_space<vmem>>, vector<8x1x128xf32>,
    %c0_80 = arith.constant 0 : index
    %c2_81 = arith.constant 2 : index
    %c0_82 = arith.constant 0 : index
    %138 = vector.load %arg8[%c0_80, %c2_81, %c0_82] : memref<8x3x128xf32, #tpu.memory_space<vmem>>, vector<8x1x128xf32>
    %139 = vector.shape_cast %138 : vector<8x1x128xf32> to vector<8x128xf32>
    %140 = vector.shape_cast %132 : vector<8x128xf32> to vector<8x1x128xf32>
    tpu.vector_store %arg8[%c0_80, %c2_81, %c0_82], %140 {strides = array<i32>} : memref<8x3x128xf32, #tpu.memory_space<vmem>>, vector<8x1x128xf32>,
    %c0_83 = arith.constant 0 : index
    %c0_84 = arith.constant 0 : index
    %141 = vector.load %arg10[%c0_83, %c0_84] : memref<8x256xf32, #tpu.memory_space<vmem>>, vector<8x128xf32>
    %142 = arith.addf %141, %134 : vector<8x128xf32>
    %c0_85 = arith.constant 0 : index
    %c0_86 = arith.constant 0 : index
    %143 = vector.load %arg10[%c0_85, %c0_86] : memref<8x256xf32, #tpu.memory_space<vmem>>, vector<8x128xf32>
    tpu.vector_store %arg10[%c0_85, %c0_86], %142 {strides = array<i32>} : memref<8x256xf32, #tpu.memory_space<vmem>>, vector<8x128xf32>,
    %c0_87 = arith.constant 0 : index
    %c0_88 = arith.constant 0 : index
    %144 = vector.load %arg10[%c0_87, %c0_88] : memref<8x256xf32, #tpu.memory_space<vmem>>, vector<8x128xf32>
    %145 = arith.truncf %144 : vector<8x128xf32> to vector<8x128xbf16>
    %c0_89 = arith.constant 0 : index
    %c0_90 = arith.constant 0 : index
    %146 = vector.load %arg5[%c0_89, %c0_90] : memref<128x256xbf16, #tpu.memory_space<vmem>>, vector<128x256xbf16>
    %cst_91 = arith.constant dense<0.000000e+00> : vector<8x256xf32>
    %147 = tpu.matmul %145, %146, %cst_91 {dimension_numbers = #tpu.dot_dimension_numbers<[1], [0], [0], [1], [0, 0, 1, 1], [], []>} : vector<8x128xbf16>, vector<128x256xbf16>, vector<8x256xf32> -> vector<8x256xf32>
    %c0_92 = arith.constant 0 : index
    %c0_93 = arith.constant 0 : index
    %148 = vector.load %arg6[%c0_92, %c0_93] : memref<1x256xf32, #tpu.memory_space<vmem>>, vector<1x256xf32>
    %149 = vector.broadcast %148 : vector<1x256xf32> to vector<8x256xf32>
    %150 = arith.addf %147, %149 : vector<8x256xf32>
    %c0_94 = arith.constant 0 : index
    %c0_95 = arith.constant 0 : index
    %151 = vector.load %arg9[%c0_94, %c0_95] : memref<8x256xf32, #tpu.memory_space<vmem>>, vector<8x256xf32>
    tpu.vector_store %arg9[%c0_94, %c0_95], %150 {strides = array<i32>} : memref<8x256xf32, #tpu.memory_space<vmem>>, vector<8x256xf32>,
    return
  }
}

</mosaic_0001>

<llo_original>
// kernel: stacked_lstm_forward.1
$region0: #{stacked_lstm_forward.1}
  #allocation0 [shape = 'u32[]', space=smem, size = 0x4, offset = 0x4, fixed_abs, tag = 'smem constant byte address 0x4 - core index']
  #allocation1 [shape = 'u32[144,128]{1,0:T(1,128)}', space=vmem, size = 0x12000, scoped, tag = 'internal scratch']
  #allocation2 [shape = 'f32[8,256]{1,0:T(8,128)}', space=vmem, size = 0x2000, scoped, tag = 'scratch operand']
  %s0 = inlined_call_operand.vmem [shape: f32[8,128], index: 0, kind: input, shape index: {}]
  %s1 = inlined_call_operand.vmem [shape: f32[8,3,128], index: 1, kind: input, shape index: {}, may-alias: {1,7}]
  %s2 = inlined_call_operand.vmem [shape: f32[8,3,128], index: 2, kind: input, shape index: {}, may-alias: {2,8}]
  %s3 = inlined_call_operand.hbm [shape: bf16[3,256,512], index: 3, kind: input, shape index: {}]
  %s4 = inlined_call_operand.vmem [shape: f32[3,1,512], index: 4, kind: input, shape index: {}]
  %s5 = inlined_call_operand.hbm [shape: bf16[128,256], index: 5, kind: input, shape index: {}]
  %s6 = inlined_call_operand.vmem [shape: f32[1,256], index: 6, kind: input, shape index: {}]
  %s7 = inlined_call_operand.vmem [shape: f32[8,3,128], index: 7, kind: output, shape index: {0}, may-alias: {1,7}]
  %s8 = inlined_call_operand.vmem [shape: f32[8,3,128], index: 8, kind: output, shape index: {1}, may-alias: {2,8}]
  %s9 = inlined_call_operand.hbm [shape: f32[8,256], index: 9, kind: output, shape index: {2}]
  %10 = xla_tuple %s7, %s8, %s9
  %s11 = sld [smem:[#allocation0]]
  $region62: #{stacked_lstm_forward.1} parent=0
    _
  %s13 = ssub.s32 1, %s11
  %s14 = scalar_select 0, %s13, %s11
  $region1: #{stacked_lstm_forward.1} parent=0
    #allocation3 [shape = 'u8[786432]{0}', space=vmem, size = 0xc0000, scoped, tag = 'input window, operand 3, single buffered']
    #allocation4 [shape = 's32[1]{0}', space=sflag, size = 0x4, scoped, tag = 'scoped memory for stacked_lstm_forward.1']
    #allocation5 [shape = 's32[1]{0}', space=sflag, size = 0x4, scoped, tag = 'scoped memory for stacked_lstm_forward.1']
    #allocation6 [shape = 'u8[65536]{0}', space=vmem, size = 0x10000, scoped, tag = 'input window, operand 5, single buffered']
    #allocation7 [shape = 's32[1]{0}', space=sflag, size = 0x4, scoped, tag = 'scoped memory for stacked_lstm_forward.1']
    #allocation8 [shape = 'u8[8192]{0}', space=vmem, size = 0x2000, scoped, tag = 'output window, operand 2, single buffered']
    %15 = vsyncpa [#allocation4], 0
    %16 = vsyncpa [#allocation7], 0
    %17 = vsyncpa [#allocation5], 0
    // Predicated region
    $region2: #{stacked_lstm_forward.1} parent=1 // pred_check
      _
    $region3: #{stacked_lstm_forward.1} parent=1 // pred_check_branch
      %19 = sbr.rel (0) target = $region5
    $region4: #{stacked_lstm_forward.1} parent=1 // pred_region
      _
    $region5: #{stacked_lstm_forward.1} parent=1 // pred_fallthru
      _
    // Predicated region
    $region6: #{stacked_lstm_forward.1} parent=1 // pred_check
      _
    $region7: #{stacked_lstm_forward.1} parent=1 // pred_check_branch
      %21 = sbr.rel (0) target = $region9
    $region8: #{stacked_lstm_forward.1} parent=1 // pred_region
      _
    $region9: #{stacked_lstm_forward.1} parent=1 // pred_fallthru
      _
    // Predicated region
    $region10: #{stacked_lstm_forward.1} parent=1 // pred_check
      _
    $region11: #{stacked_lstm_forward.1} parent=1 // pred_check_branch
      %23 = sbr.rel (0) target = $region13
    $region12: #{stacked_lstm_forward.1} parent=1 // pred_region
      _
    $region13: #{stacked_lstm_forward.1} parent=1 // pred_fallthru
      _
    // Predicated region
    $region14: #{stacked_lstm_forward.1} parent=1 // pred_check
      _
    $region15: #{stacked_lstm_forward.1} parent=1 // pred_check_branch
      %25 = sbr.rel (0) target = $region17
    $region16: #{stacked_lstm_forward.1} parent=1 // pred_region
      %s27 = ssub.s32 24576, 24576
      %28 = vsyncadd [#allocation4], %s27
      %s29 = sshll.u32 [#allocation3], 4
      %s30 = int_to_ptr.vmem [resolvable:$true] %s29
      %35 = dma.hbm_to_vmem [thread:$0]  %s3, 24576, %s30, [#allocation4], 256, 256, 16
    $region17: #{stacked_lstm_forward.1} parent=1 // pred_fallthru
      _
    // Predicated region
    $region18: #{stacked_lstm_forward.1} parent=1 // pred_check
      _
    $region19: #{stacked_lstm_forward.1} parent=1 // pred_check_branch
      %37 = sbr.rel (0) target = $region21
    $region20: #{stacked_lstm_forward.1} parent=1 // pred_region
      _
    $region21: #{stacked_lstm_forward.1} parent=1 // pred_fallthru
      _
    // Predicated region
    $region22: #{stacked_lstm_forward.1} parent=1 // pred_check
      _
    $region23: #{stacked_lstm_forward.1} parent=1 // pred_check_branch
      %39 = sbr.rel (0) target = $region25
    $region24: #{stacked_lstm_forward.1} parent=1 // pred_region
      %s41 = ssub.s32 2048, 2048
      %42 = vsyncadd [#allocation7], %s41
      %s43 = sshll.u32 [#allocation6], 4
      %s44 = int_to_ptr.vmem [resolvable:$true] %s43
      %49 = dma.hbm_to_vmem [thread:$0]  %s5, 2048, %s44, [#allocation7], 128, 128, 8
    $region25: #{stacked_lstm_forward.1} parent=1 // pred_fallthru
      _
    // Predicated region
    $region26: #{stacked_lstm_forward.1} parent=1 // pred_check
      _
    $region27: #{stacked_lstm_forward.1} parent=1 // pred_check_branch
      %51 = sbr.rel (0) target = $region29
    $region28: #{stacked_lstm_forward.1} parent=1 // pred_region
      _
    $region29: #{stacked_lstm_forward.1} parent=1 // pred_fallthru
      _
    // Predicated region
    $region30: #{stacked_lstm_forward.1} parent=1 // pred_check
      _
    $region31: #{stacked_lstm_forward.1} parent=1 // pred_check_branch
      %53 = sbr.rel (0) target = $region33
    $region32: #{stacked_lstm_forward.1} parent=1 // pred_region
      %54 = dma.done [#allocation4], 24576
    $region33: #{stacked_lstm_forward.1} parent=1 // pred_fallthru
      _
    // Predicated region
    $region34: #{stacked_lstm_forward.1} parent=1 // pred_check
      _
    $region35: #{stacked_lstm_forward.1} parent=1 // pred_check_branch
      %56 = sbr.rel (0) target = $region37
    $region36: #{stacked_lstm_forward.1} parent=1 // pred_region
      %57 = dma.done [#allocation7], 2048
    $region37: #{stacked_lstm_forward.1} parent=1 // pred_fallthru
      _
    %v59 = vld [vmem:[%s0] sm:$0xff]
    %60 = vst [vmem:[#allocation2] sm:$0xff] %v59
    %v61 = vld [vmem:[%s1] sm:$0x1]
    %v62 = vld [vmem:[%s1 + $0x4] sm:$0x1]
    %v63 = vld [vmem:[%s1 + $0x8] sm:$0x1]
    %v64 = vld [vmem:[%s1 + $0xc] sm:$0x1]
    %v65 = vld [vmem:[%s1 + $0x10] sm:$0x1]
    %v66 = vld [vmem:[%s1 + $0x14] sm:$0x1]
    %v67 = vld [vmem:[%s1 + $0x18] sm:$0x1]
    %v68 = vld [vmem:[%s1 + $0x1c] sm:$0x1]
    %v69 = vld [vmem:[%s2] sm:$0x1]
    %v70 = vld [vmem:[%s2 + $0x4] sm:$0x1]
    %v71 = vld [vmem:[%s2 + $0x8] sm:$0x1]
    %v72 = vld [vmem:[%s2 + $0xc] sm:$0x1]
    %v73 = vld [vmem:[%s2 + $0x10] sm:$0x1]
    %v74 = vld [vmem:[%s2 + $0x14] sm:$0x1]
    %v75 = vld [vmem:[%s2 + $0x18] sm:$0x1]
    %v76 = vld [vmem:[%s2 + $0x1c] sm:$0x1]
    %v85 = vrot.slane %v62, 7
    %vm86 = vcmask 1041409
    %v87 = vsel %vm86, %v85, %v61
    %v88 = vrot.slane %v63, 6
    %vm89 = vcmask 1042434
    %v90 = vsel %vm89, %v88, %v87
    %v91 = vrot.slane %v64, 5
    %vm92 = vcmask 1043459
    %v93 = vsel %vm92, %v91, %v90
    %v94 = vrot.slane %v65, 4
    %vm95 = vcmask 1044484
    %v96 = vsel %vm95, %v94, %v93
    %v97 = vrot.slane %v66, 3
    %vm98 = vcmask 1045509
    %v99 = vsel %vm98, %v97, %v96
    %v100 = vrot.slane %v67, 2
    %vm101 = vcmask 1046534
    %v102 = vsel %vm101, %v100, %v99
    %v103 = vrot.slane %v68, 1
    %vm104 = vcmask 1047559
    %v105 = vsel %vm104, %v103, %v102
    %107 = vst [vmem:[#allocation2 + $0x8] sm:$0xff] %v105
    %v108 = vld [vmem:[#allocation2] sm:$0xff]
    %v109 = vld [vmem:[#allocation2 + $0x8] sm:$0xff]
    %v110 = vpack.c.bf16 %v108, %v108
    %v111 = vpack.c.bf16 %v109, %v109
    %v112 = vld [vmem:[#allocation3] sm:$0xff]
    %v113 = vld [vmem:[#allocation3 + $0x8] sm:$0xff]
    %v114 = vld [vmem:[#allocation3 + $0x10] sm:$0xff]
    %v115 = vld [vmem:[#allocation3 + $0x18] sm:$0xff]
    %v116 = vld [vmem:[#allocation3 + $0x20] sm:$0xff]
    %v117 = vld [vmem:[#allocation3 + $0x28] sm:$0xff]
    %v118 = vld [vmem:[#allocation3 + $0x30] sm:$0xff]
    %v119 = vld [vmem:[#allocation3 + $0x38] sm:$0xff]
    %v120 = vld [vmem:[#allocation3 + $0x40] sm:$0xff]
    %v121 = vld [vmem:[#allocation3 + $0x48] sm:$0xff]
    %v122 = vld [vmem:[#allocation3 + $0x50] sm:$0xff]
    %v123 = vld [vmem:[#allocation3 + $0x58] sm:$0xff]
    %v124 = vld [vmem:[#allocation3 + $0x60] sm:$0xff]
    %v125 = vld [vmem:[#allocation3 + $0x68] sm:$0xff]
    %v126 = vld [vmem:[#allocation3 + $0x70] sm:$0xff]
    %v127 = vld [vmem:[#allocation3 + $0x78] sm:$0xff]
    %v128 = vld [vmem:[#allocation3 + $0x80] sm:$0xff]
    %v129 = vld [vmem:[#allocation3 + $0x88] sm:$0xff]
    %v130 = vld [vmem:[#allocation3 + $0x90] sm:$0xff]
    %v131 = vld [vmem:[#allocation3 + $0x98] sm:$0xff]
    %v132 = vld [vmem:[#allocation3 + $0xa0] sm:$0xff]
    %v133 = vld [vmem:[#allocation3 + $0xa8] sm:$0xff]
    %v134 = vld [vmem:[#allocation3 + $0xb0] sm:$0xff]
    %v135 = vld [vmem:[#allocation3 + $0xb8] sm:$0xff]
    %v136 = vld [vmem:[#allocation3 + $0xc0] sm:$0xff]
    %v137 = vld [vmem:[#allocation3 + $0xc8] sm:$0xff]
    %v138 = vld [vmem:[#allocation3 + $0xd0] sm:$0xff]
    %v139 = vld [vmem:[#allocation3 + $0xd8] sm:$0xff]
    %v140 = vld [vmem:[#allocation3 + $0xe0] sm:$0xff]
    %v141 = vld [vmem:[#allocation3 + $0xe8] sm:$0xff]
    %v142 = vld [vmem:[#allocation3 + $0xf0] sm:$0xff]
    %v143 = vld [vmem:[#allocation3 + $0xf8] sm:$0xff]
    %v144 = vld [vmem:[#allocation3 + $0x100] sm:$0xff]
    %v145 = vld [vmem:[#allocation3 + $0x108] sm:$0xff]
    %v146 = vld [vmem:[#allocation3 + $0x110] sm:$0xff]
    %v147 = vld [vmem:[#allocation3 + $0x118] sm:$0xff]
    %v148 = vld [vmem:[#allocation3 + $0x120] sm:$0xff]
    %v149 = vld [vmem:[#allocation3 + $0x128] sm:$0xff]
    %v150 = vld [vmem:[#allocation3 + $0x130] sm:$0xff]
    %v151 = vld [vmem:[#allocation3 + $0x138] sm:$0xff]
    %v152 = vld [vmem:[#allocation3 + $0x140] sm:$0xff]
    %v153 = vld [vmem:[#allocation3 + $0x148] sm:$0xff]
    %v154 = vld [vmem:[#allocation3 + $0x150] sm:$0xff]
    %v155 = vld [vmem:[#allocation3 + $0x158] sm:$0xff]
    %v156 = vld [vmem:[#allocation3 + $0x160] sm:$0xff]
    %v157 = vld [vmem:[#allocation3 + $0x168] sm:$0xff]
    %v158 = vld [vmem:[#allocation3 + $0x170] sm:$0xff]
    %v159 = vld [vmem:[#allocation3 + $0x178] sm:$0xff]
    %v160 = vld [vmem:[#allocation3 + $0x180] sm:$0xff]
    %v161 = vld [vmem:[#allocation3 + $0x188] sm:$0xff]
    %v162 = vld [vmem:[#allocation3 + $0x190] sm:$0xff]
    %v163 = vld [vmem:[#allocation3 + $0x198] sm:$0xff]
    %v164 = vld [vmem:[#allocation3 + $0x1a0] sm:$0xff]
    %v165 = vld [vmem:[#allocation3 + $0x1a8] sm:$0xff]
    %v166 = vld [vmem:[#allocation3 + $0x1b0] sm:$0xff]
    %v167 = vld [vmem:[#allocation3 + $0x1b8] sm:$0xff]
    %v168 = vld [vmem:[#allocation3 + $0x1c0] sm:$0xff]
    %v169 = vld [vmem:[#allocation3 + $0x1c8] sm:$0xff]
    %v170 = vld [vmem:[#allocation3 + $0x1d0] sm:$0xff]
    %v171 = vld [vmem:[#allocation3 + $0x1d8] sm:$0xff]
    %v172 = vld [vmem:[#allocation3 + $0x1e0] sm:$0xff]
    %v173 = vld [vmem:[#allocation3 + $0x1e8] sm:$0xff]
    %v174 = vld [vmem:[#allocation3 + $0x1f0] sm:$0xff]
    %v175 = vld [vmem:[#allocation3 + $0x1f8] sm:$0xff]
    %v176 = vld [vmem:[%s4] sm:$0xf]
    %v178 = vlaneseq
    %v179 = vshrl.u32 %v178, 7
    %v180 = vsub.s32 0, %v179
    %v181 = vrot.slane %v176, %v180
    %v182 = vlaneseq
    %v183 = vshrl.u32 %v182, 7
    %v184 = vsub.s32 1, %v183
    %v185 = vrot.slane %v176, %v184
    %v186 = vlaneseq
    %v187 = vshrl.u32 %v186, 7
    %v188 = vsub.s32 2, %v187
    %v189 = vrot.slane %v176, %v188
    %v190 = vlaneseq
    %v191 = vshrl.u32 %v190, 7
    %v192 = vsub.s32 3, %v191
    %v193 = vrot.slane %v176, %v192
    %v262 = vunpack.c.l.b16 %v112
    %v263 = vunpack.c.h.b16 %v112
    %v264 = vunpack.c.l.b16 %v113
    %v265 = vunpack.c.h.b16 %v113
    %v266 = vunpack.c.l.b16 %v114
    %v267 = vunpack.c.h.b16 %v114
    %v268 = vunpack.c.l.b16 %v115
    %v269 = vunpack.c.h.b16 %v115
    %v270 = vunpack.c.l.b16 %v116
    %v271 = vunpack.c.h.b16 %v116
    %v272 = vunpack.c.l.b16 %v117
    %v273 = vunpack.c.h.b16 %v117
    %v274 = vunpack.c.l.b16 %v118
    %v275 = vunpack.c.h.b16 %v118
    %v276 = vunpack.c.l.b16 %v119
    %v277 = vunpack.c.h.b16 %v119
    %v278 = vunpack.c.l.b16 %v120
    %v279 = vunpack.c.h.b16 %v120
    %v280 = vunpack.c.l.b16 %v121
    %v281 = vunpack.c.h.b16 %v121
    %v282 = vunpack.c.l.b16 %v122
    %v283 = vunpack.c.h.b16 %v122
    %v284 = vunpack.c.l.b16 %v123
    %v285 = vunpack.c.h.b16 %v123
    %v286 = vunpack.c.l.b16 %v124
    %v287 = vunpack.c.h.b16 %v124
    %v288 = vunpack.c.l.b16 %v125
    %v289 = vunpack.c.h.b16 %v125
    %v290 = vunpack.c.l.b16 %v126
    %v291 = vunpack.c.h.b16 %v126
    %v292 = vunpack.c.l.b16 %v127
    %v293 = vunpack.c.h.b16 %v127
    %v294 = vunpack.c.l.b16 %v128
    %v295 = vunpack.c.h.b16 %v128
    %v296 = vunpack.c.l.b16 %v129
    %v297 = vunpack.c.h.b16 %v129
    %v298 = vunpack.c.l.b16 %v130
    %v299 = vunpack.c.h.b16 %v130
    %v300 = vunpack.c.l.b16 %v131
    %v301 = vunpack.c.h.b16 %v131
    %v302 = vunpack.c.l.b16 %v132
    %v303 = vunpack.c.h.b16 %v132
    %v304 = vunpack.c.l.b16 %v133
    %v305 = vunpack.c.h.b16 %v133
    %v306 = vunpack.c.l.b16 %v134
    %v307 = vunpack.c.h.b16 %v134
    %v308 = vunpack.c.l.b16 %v135
    %v309 = vunpack.c.h.b16 %v135
    %v310 = vunpack.c.l.b16 %v136
    %v311 = vunpack.c.h.b16 %v136
    %v312 = vunpack.c.l.b16 %v137
    %v313 = vunpack.c.h.b16 %v137
    %v314 = vunpack.c.l.b16 %v138
    %v315 = vunpack.c.h.b16 %v138
    %v316 = vunpack.c.l.b16 %v139
    %v317 = vunpack.c.h.b16 %v139
    %v318 = vunpack.c.l.b16 %v140
    %v319 = vunpack.c.h.b16 %v140
    %v320 = vunpack.c.l.b16 %v141
    %v321 = vunpack.c.h.b16 %v141
    %v322 = vunpack.c.l.b16 %v142
    %v323 = vunpack.c.h.b16 %v142
    %v324 = vunpack.c.l.b16 %v143
    %v325 = vunpack.c.h.b16 %v143
    %v326 = vunpack.c.l.b16 %v144
    %v327 = vunpack.c.h.b16 %v144
    %v328 = vunpack.c.l.b16 %v145
    %v329 = vunpack.c.h.b16 %v145
    %v330 = vunpack.c.l.b16 %v146
    %v331 = vunpack.c.h.b16 %v146
    %v332 = vunpack.c.l.b16 %v147
    %v333 = vunpack.c.h.b16 %v147
    %v334 = vunpack.c.l.b16 %v148
    %v335 = vunpack.c.h.b16 %v148
    %v336 = vunpack.c.l.b16 %v149
    %v337 = vunpack.c.h.b16 %v149
    %v338 = vunpack.c.l.b16 %v150
    %v339 = vunpack.c.h.b16 %v150
    %v340 = vunpack.c.l.b16 %v151
    %v341 = vunpack.c.h.b16 %v151
    %v342 = vunpack.c.l.b16 %v152
    %v343 = vunpack.c.h.b16 %v152
    %v344 = vunpack.c.l.b16 %v153
    %v345 = vunpack.c.h.b16 %v153
    %v346 = vunpack.c.l.b16 %v154
    %v347 = vunpack.c.h.b16 %v154
    %v348 = vunpack.c.l.b16 %v155
    %v349 = vunpack.c.h.b16 %v155
    %v350 = vunpack.c.l.b16 %v156
    %v351 = vunpack.c.h.b16 %v156
    %v352 = vunpack.c.l.b16 %v157
    %v353 = vunpack.c.h.b16 %v157
    %v354 = vunpack.c.l.b16 %v158
    %v355 = vunpack.c.h.b16 %v158
    %v356 = vunpack.c.l.b16 %v159
    %v357 = vunpack.c.h.b16 %v159
    %v358 = vunpack.c.l.b16 %v160
    %v359 = vunpack.c.h.b16 %v160
    %v360 = vunpack.c.l.b16 %v161
    %v361 = vunpack.c.h.b16 %v161
    %v362 = vunpack.c.l.b16 %v162
    %v363 = vunpack.c.h.b16 %v162
    %v364 = vunpack.c.l.b16 %v163
    %v365 = vunpack.c.h.b16 %v163
    %v366 = vunpack.c.l.b16 %v164
    %v367 = vunpack.c.h.b16 %v164
    %v368 = vunpack.c.l.b16 %v165
    %v369 = vunpack.c.h.b16 %v165
    %v370 = vunpack.c.l.b16 %v166
    %v371 = vunpack.c.h.b16 %v166
    %v372 = vunpack.c.l.b16 %v167
    %v373 = vunpack.c.h.b16 %v167
    %v374 = vunpack.c.l.b16 %v168
    %v375 = vunpack.c.h.b16 %v168
    %v376 = vunpack.c.l.b16 %v169
    %v377 = vunpack.c.h.b16 %v169
    %v378 = vunpack.c.l.b16 %v170
    %v379 = vunpack.c.h.b16 %v170
    %v380 = vunpack.c.l.b16 %v171
    %v381 = vunpack.c.h.b16 %v171
    %v382 = vunpack.c.l.b16 %v172
    %v383 = vunpack.c.h.b16 %v172
    %v384 = vunpack.c.l.b16 %v173
    %v385 = vunpack.c.h.b16 %v173
    %v386 = vunpack.c.l.b16 %v174
    %v387 = vunpack.c.h.b16 %v174
    %v388 = vunpack.c.l.b16 %v175
    %v389 = vunpack.c.h.b16 %v175
    %v390 = vpack.c.b16 %v266, %v262
    %v391 = vpack.c.b16 %v267, %v263
    %v392 = vpack.c.b16 %v268, %v264
    %v393 = vpack.c.b16 %v269, %v265
    %v394 = vpack.c.b16 %v274, %v270
    %v395 = vpack.c.b16 %v275, %v271
    %v396 = vpack.c.b16 %v276, %v272
    %v397 = vpack.c.b16 %v277, %v273
    %v398 = vpack.c.b16 %v282, %v278
    %v399 = vpack.c.b16 %v283, %v279
    %v400 = vpack.c.b16 %v284, %v280
    %v401 = vpack.c.b16 %v285, %v281
    %v402 = vpack.c.b16 %v290, %v286
    %v403 = vpack.c.b16 %v291, %v287
    %v404 = vpack.c.b16 %v292, %v288
    %v405 = vpack.c.b16 %v293, %v289
    %v406 = vpack.c.b16 %v298, %v294
    %v407 = vpack.c.b16 %v299, %v295
    %v408 = vpack.c.b16 %v300, %v296
    %v409 = vpack.c.b16 %v301, %v297
    %v410 = vpack.c.b16 %v306, %v302
    %v411 = vpack.c.b16 %v307, %v303
    %v412 = vpack.c.b16 %v308, %v304
    %v413 = vpack.c.b16 %v309, %v305
    %v414 = vpack.c.b16 %v314, %v310
    %v415 = vpack.c.b16 %v315, %v311
    %v416 = vpack.c.b16 %v316, %v312
    %v417 = vpack.c.b16 %v317, %v313
    %v418 = vpack.c.b16 %v322, %v318
    %v419 = vpack.c.b16 %v323, %v319
    %v420 = vpack.c.b16 %v324, %v320
    %v421 = vpack.c.b16 %v325, %v321
    %v422 = vpack.c.b16 %v330, %v326
    %v423 = vpack.c.b16 %v331, %v327
    %v424 = vpack.c.b16 %v332, %v328
    %v425 = vpack.c.b16 %v333, %v329
    %v426 = vpack.c.b16 %v338, %v334
    %v427 = vpack.c.b16 %v339, %v335
    %v428 = vpack.c.b16 %v340, %v336
    %v429 = vpack.c.b16 %v341, %v337
    %v430 = vpack.c.b16 %v346, %v342
    %v431 = vpack.c.b16 %v347, %v343
    %v432 = vpack.c.b16 %v348, %v344
    %v433 = vpack.c.b16 %v349, %v345
    %v434 = vpack.c.b16 %v354, %v350
    %v435 = vpack.c.b16 %v355, %v351
    %v436 = vpack.c.b16 %v356, %v352
    %v437 = vpack.c.b16 %v357, %v353
    %v438 = vpack.c.b16 %v362, %v358
    %v439 = vpack.c.b16 %v363, %v359
    %v440 = vpack.c.b16 %v364, %v360
    %v441 = vpack.c.b16 %v365, %v361
    %v442 = vpack.c.b16 %v370, %v366
    %v443 = vpack.c.b16 %v371, %v367
    %v444 = vpack.c.b16 %v372, %v368
    %v445 = vpack.c.b16 %v373, %v369
    %v446 = vpack.c.b16 %v378, %v374
    %v447 = vpack.c.b16 %v379, %v375
    %v448 = vpack.c.b16 %v380, %v376
    %v449 = vpack.c.b16 %v381, %v377
    %v450 = vpack.c.b16 %v386, %v382
    %v451 = vpack.c.b16 %v387, %v383
    %v452 = vpack.c.b16 %v388, %v384
    %v453 = vpack.c.b16 %v389, %v385
    %518 = vmatprep.subr.bf16.mxu0 %v419
    %519 = vmatpush1.bf16.msra.mxu0 %v418
    %520 = vmatprep.subr.bf16.mxu0 %v415
    %521 = vmatpush1.bf16.msra.mxu0 %v414
    %522 = vmatprep.subr.bf16.mxu0 %v411
    %523 = vmatpush1.bf16.msra.mxu0 %v410
    %524 = vmatprep.subr.bf16.mxu0 %v407
    %525 = vmatpush1.bf16.msra.mxu0 %v406
    %526 = vmatprep.subr.bf16.mxu0 %v403
    %527 = vmatpush1.bf16.msra.mxu0 %v402
    %528 = vmatprep.subr.bf16.mxu0 %v399
    %529 = vmatpush1.bf16.msra.mxu0 %v398
    %530 = vmatprep.subr.bf16.mxu0 %v395
    %531 = vmatpush1.bf16.msra.mxu0 %v394
    %532 = vmatprep.subr.bf16.mxu0 %v391
    %533 = vmatpush1.bf16.msra.mxu0 %v390
    %534 = vmatprep.subr.bf16.mxu0 %v451
    %535 = vmatpush2.bf16.msra.mxu0 %v450
    %536 = vmatprep.subr.bf16.mxu0 %v447
    %537 = vmatpush2.bf16.msra.mxu0 %v446
    %538 = vmatprep.subr.bf16.mxu0 %v443
    %539 = vmatpush2.bf16.msra.mxu0 %v442
    %540 = vmatprep.subr.bf16.mxu0 %v439
    %541 = vmatpush2.bf16.msra.mxu0 %v438
    %542 = vmatprep.subr.bf16.mxu0 %v435
    %543 = vmatpush2.bf16.msra.mxu0 %v434
    %544 = vmatprep.subr.bf16.mxu0 %v431
    %545 = vmatpush2.bf16.msra.mxu0 %v430
    %546 = vmatprep.subr.bf16.mxu0 %v427
    %547 = vmatpush2.bf16.msra.mxu0 %v426
    %548 = vmatprep.subr.bf16.mxu0 %v423
    %549 = vmatpush2.bf16.msra.mxu0 %v422
    %550 = vmatprep.mubr.bf16.mxu0 %v111
    %551 = vmatmul.mubr.bf16.gmra.mxu0 %v110
    %v552 = vpop.f32.mrf.mxu0
    %v553 = vadd.f32 %v181, %v552
    %v554 = vpop.f32.mrf.mxu0
    %v555 = vadd.f32 %v185, %v554
    %v556 = vpop.f32.mrf.mxu0
    %v557 = vpop.f32.mrf.mxu0
    %558 = vdwg.mxu0
    %559 = vmatprep.subr.bf16.mxu0 %v421
    %560 = vmatpush1.bf16.msra.mxu0 %v420
    %561 = vmatprep.subr.bf16.mxu0 %v417
    %562 = vmatpush1.bf16.msra.mxu0 %v416
    %563 = vmatprep.subr.bf16.mxu0 %v413
    %564 = vmatpush1.bf16.msra.mxu0 %v412
    %565 = vmatprep.subr.bf16.mxu0 %v409
    %566 = vmatpush1.bf16.msra.mxu0 %v408
    %567 = vmatprep.subr.bf16.mxu0 %v405
    %568 = vmatpush1.bf16.msra.mxu0 %v404
    %569 = vmatprep.subr.bf16.mxu0 %v401
    %570 = vmatpush1.bf16.msra.mxu0 %v400
    %571 = vmatprep.subr.bf16.mxu0 %v397
    %572 = vmatpush1.bf16.msra.mxu0 %v396
    %573 = vmatprep.subr.bf16.mxu0 %v393
    %574 = vmatpush1.bf16.msra.mxu0 %v392
    %575 = vmatprep.subr.bf16.mxu0 %v453
    %576 = vmatpush2.bf16.msra.mxu0 %v452
    %577 = vmatprep.subr.bf16.mxu0 %v449
    %578 = vmatpush2.bf16.msra.mxu0 %v448
    %579 = vmatprep.subr.bf16.mxu0 %v445
    %580 = vmatpush2.bf16.msra.mxu0 %v444
    %581 = vmatprep.subr.bf16.mxu0 %v441
    %582 = vmatpush2.bf16.msra.mxu0 %v440
    %583 = vmatprep.subr.bf16.mxu0 %v437
    %584 = vmatpush2.bf16.msra.mxu0 %v436
    %585 = vmatprep.subr.bf16.mxu0 %v433
    %586 = vmatpush2.bf16.msra.mxu0 %v432
    %587 = vmatprep.subr.bf16.mxu0 %v429
    %588 = vmatpush2.bf16.msra.mxu0 %v428
    %589 = vmatprep.subr.bf16.mxu0 %v425
    %590 = vmatpush2.bf16.msra.mxu0 %v424
    %591 = vmatprep.mubr.bf16.mxu0 %v111
    %592 = vmatmul.mubr.bf16.gmra.mxu0 %v110
    %v593 = vpop.f32.mrf.mxu0
    %v594 = vadd.f32 %v189, %v593
    %v595 = vpop.f32.mrf.mxu0
    %v596 = vadd.f32 %v193, %v595
    %v597 = vpop.f32.mrf.mxu0
    %v598 = vpop.f32.mrf.mxu0
    %599 = vdwg.mxu0
    %v600 = vxor.u32 %v553, 2147483648
    %v601 = vmul.f32 %v600, 1.442695
    %v602 = vpow.pop %v601
    %v603 = vadd.f32 %v602, 1.0
    %v604 = vrcp.pop %v603
    %v605 = vmul.f32 1.0, %v604
    %v606 = vxor.u32 %v555, 2147483648
    %v607 = vmul.f32 %v606, 1.442695
    %v608 = vpow.pop %v607
    %v609 = vadd.f32 %v608, 1.0
    %v610 = vrcp.pop %v609
    %v611 = vmul.f32 1.0, %v610
    %v612 = vtanh.pop %v594
    %v613 = vxor.u32 %v596, 2147483648
    %v614 = vmul.f32 %v613, 1.442695
    %v615 = vpow.pop %v614
    %v616 = vadd.f32 %v615, 1.0
    %v617 = vrcp.pop %v616
    %v618 = vmul.f32 1.0, %v617
    %v627 = vrot.slane %v70, 7
    %v628 = vsel %vm86, %v627, %v69
    %v629 = vrot.slane %v71, 6
    %v630 = vsel %vm89, %v629, %v628
    %v631 = vrot.slane %v72, 5
    %v632 = vsel %vm92, %v631, %v630
    %v633 = vrot.slane %v73, 4
    %v634 = vsel %vm95, %v633, %v632
    %v635 = vrot.slane %v74, 3
    %v636 = vsel %vm98, %v635, %v634
    %v637 = vrot.slane %v75, 2
    %v638 = vsel %vm101, %v637, %v636
    %v639 = vrot.slane %v76, 1
    %v640 = vsel %vm104, %v639, %v638
    %v642 = vmul.f32 %v611, %v640
    %v643 = vmul.f32 %v605, %v612
    %v644 = vadd.f32 %v642, %v643
    %v645 = vtanh.pop %v644
    %v646 = vmul.f32 %v618, %v645
    %v648 = vcombine.high %v646, %v646
    %v650 = vunpack.c.l.s4 1966171168
    %v651 = vunpack.c.0.s8 %v650
    %v652 = vlaneseq
    %v653 = vshrl.u32 %v652, 7
    %v654 = vsub.s32 %v651, %v653
    %v655 = vrot.slane %v646, %v654
    %v657 = vunpack.c.l.s4 1966171168
    %v658 = vunpack.c.0.s8 %v657
    %v659 = vlaneseq
    %v660 = vshrl.u32 %v659, 7
    %v661 = vsub.s32 %v658, %v660
    %v662 = vrot.slane %v648, %v661
    %v663 = vcombine.high %v655, %v655
    %v664 = vcombine.high %v662, %v662
    %v666 = vunpack.c.l.s4 1966171168
    %v667 = vunpack.c.0.s8 %v666
    %v668 = vlaneseq
    %v669 = vshrl.u32 %v668, 7
    %v670 = vsub.s32 %v667, %v669
    %v671 = vrot.slane %v655, %v670
    %v673 = vunpack.c.l.s4 1966171168
    %v674 = vunpack.c.0.s8 %v673
    %v675 = vlaneseq
    %v676 = vshrl.u32 %v675, 7
    %v677 = vsub.s32 %v674, %v676
    %v678 = vrot.slane %v662, %v677
    %v680 = vunpack.c.l.s4 1966171168
    %v681 = vunpack.c.0.s8 %v680
    %v682 = vlaneseq
    %v683 = vshrl.u32 %v682, 7
    %v684 = vsub.s32 %v681, %v683
    %v685 = vrot.slane %v663, %v684
    %v687 = vunpack.c.l.s4 1966171168
    %v688 = vunpack.c.0.s8 %v687
    %v689 = vlaneseq
    %v690 = vshrl.u32 %v689, 7
    %v691 = vsub.s32 %v688, %v690
    %v692 = vrot.slane %v664, %v691
    %v693 = vcombine.high %v671, %v671
    %v694 = vcombine.high %v678, %v678
    %v695 = vcombine.high %v685, %v685
    %v696 = vcombine.high %v692, %v692
    %705 = vst [vmem:[%s7] sm:$0x1] %v671
    %706 = vst [vmem:[%s7 + $0x4] sm:$0x1] %v685
    %707 = vst [vmem:[%s7 + $0x8] sm:$0x1] %v693
    %708 = vst [vmem:[%s7 + $0xc] sm:$0x1] %v695
    %709 = vst [vmem:[%s7 + $0x10] sm:$0x1] %v678
    %710 = vst [vmem:[%s7 + $0x14] sm:$0x1] %v692
    %711 = vst [vmem:[%s7 + $0x18] sm:$0x1] %v694
    %712 = vst [vmem:[%s7 + $0x1c] sm:$0x1] %v696
    %v714 = vcombine.high %v644, %v644
    %v716 = vunpack.c.l.s4 1966171168
    %v717 = vunpack.c.0.s8 %v716
    %v718 = vlaneseq
    %v719 = vshrl.u32 %v718, 7
    %v720 = vsub.s32 %v717, %v719
    %v721 = vrot.slane %v644, %v720
    %v723 = vunpack.c.l.s4 1966171168
    %v724 = vunpack.c.0.s8 %v723
    %v725 = vlaneseq
    %v726 = vshrl.u32 %v725, 7
    %v727 = vsub.s32 %v724, %v726
    %v728 = vrot.slane %v714, %v727
    %v729 = vcombine.high %v721, %v721
    %v730 = vcombine.high %v728, %v728
    %v732 = vunpack.c.l.s4 1966171168
    %v733 = vunpack.c.0.s8 %v732
    %v734 = vlaneseq
    %v735 = vshrl.u32 %v734, 7
    %v736 = vsub.s32 %v733, %v735
    %v737 = vrot.slane %v721, %v736
    %v739 = vunpack.c.l.s4 1966171168
    %v740 = vunpack.c.0.s8 %v739
    %v741 = vlaneseq
    %v742 = vshrl.u32 %v741, 7
    %v743 = vsub.s32 %v740, %v742
    %v744 = vrot.slane %v728, %v743
    %v746 = vunpack.c.l.s4 1966171168
    %v747 = vunpack.c.0.s8 %v746
    %v748 = vlaneseq
    %v749 = vshrl.u32 %v748, 7
    %v750 = vsub.s32 %v747, %v749
    %v751 = vrot.slane %v729, %v750
    %v753 = vunpack.c.l.s4 1966171168
    %v754 = vunpack.c.0.s8 %v753
    %v755 = vlaneseq
    %v756 = vshrl.u32 %v755, 7
    %v757 = vsub.s32 %v754, %v756
    %v758 = vrot.slane %v730, %v757
    %v759 = vcombine.high %v737, %v737
    %v760 = vcombine.high %v744, %v744
    %v761 = vcombine.high %v751, %v751
    %v762 = vcombine.high %v758, %v758
    %771 = vst [vmem:[%s8] sm:$0x1] %v737
    %772 = vst [vmem:[%s8 + $0x4] sm:$0x1] %v751
    %773 = vst [vmem:[%s8 + $0x8] sm:$0x1] %v759
    %774 = vst [vmem:[%s8 + $0xc] sm:$0x1] %v761
    %775 = vst [vmem:[%s8 + $0x10] sm:$0x1] %v744
    %776 = vst [vmem:[%s8 + $0x14] sm:$0x1] %v758
    %777 = vst [vmem:[%s8 + $0x18] sm:$0x1] %v760
    %778 = vst [vmem:[%s8 + $0x1c] sm:$0x1] %v762
    %779 = vst [vmem:[#allocation2] sm:$0xff] %v646
    %v780 = vld [vmem:[%s1 + $0x1] sm:$0x1]
    %v781 = vld [vmem:[%s1 + $0x5] sm:$0x1]
    %v782 = vld [vmem:[%s1 + $0x9] sm:$0x1]
    %v783 = vld [vmem:[%s1 + $0xd] sm:$0x1]
    %v784 = vld [vmem:[%s1 + $0x11] sm:$0x1]
    %v785 = vld [vmem:[%s1 + $0x15] sm:$0x1]
    %v786 = vld [vmem:[%s1 + $0x19] sm:$0x1]
    %v787 = vld [vmem:[%s1 + $0x1d] sm:$0x1]
    %v788 = vld [vmem:[%s2 + $0x1] sm:$0x1]
    %v789 = vld [vmem:[%s2 + $0x5] sm:$0x1]
    %v790 = vld [vmem:[%s2 + $0x9] sm:$0x1]
    %v791 = vld [vmem:[%s2 + $0xd] sm:$0x1]
    %v792 = vld [vmem:[%s2 + $0x11] sm:$0x1]
    %v793 = vld [vmem:[%s2 + $0x15] sm:$0x1]
    %v794 = vld [vmem:[%s2 + $0x19] sm:$0x1]
    %v795 = vld [vmem:[%s2 + $0x1d] sm:$0x1]
    %v804 = vrot.slane %v781, 7
    %v805 = vsel %vm86, %v804, %v780
    %v806 = vrot.slane %v782, 6
    %v807 = vsel %vm89, %v806, %v805
    %v808 = vrot.slane %v783, 5
    %v809 = vsel %vm92, %v808, %v807
    %v810 = vrot.slane %v784, 4
    %v811 = vsel %vm95, %v810, %v809
    %v812 = vrot.slane %v785, 3
    %v813 = vsel %vm98, %v812, %v811
    %v814 = vrot.slane %v786, 2
    %v815 = vsel %vm101, %v814, %v813
    %v816 = vrot.slane %v787, 1
    %v817 = vsel %vm104, %v816, %v815
    %819 = vst [vmem:[#allocation2 + $0x8] sm:$0xff] %v817
    %v820 = vld [vmem:[#allocation2] sm:$0xff]
    %v821 = vld [vmem:[#allocation2 + $0x8] sm:$0xff]
    %v822 = vpack.c.bf16 %v820, %v820
    %v823 = vpack.c.bf16 %v821, %v821
    %s824 = scalar_lea.vmem [#allocation3], 512
    %v825 = vld [vmem:[%s824] sm:$0xff]
    %v826 = vld [vmem:[%s824 + $0x8] sm:$0xff]
    %v827 = vld [vmem:[%s824 + $0x10] sm:$0xff]
    %v828 = vld [vmem:[%s824 + $0x18] sm:$0xff]
    %v829 = vld [vmem:[%s824 + $0x20] sm:$0xff]
    %v830 = vld [vmem:[%s824 + $0x28] sm:$0xff]
    %v831 = vld [vmem:[%s824 + $0x30] sm:$0xff]
    %v832 = vld [vmem:[%s824 + $0x38] sm:$0xff]
    %v833 = vld [vmem:[%s824 + $0x40] sm:$0xff]
    %v834 = vld [vmem:[%s824 + $0x48] sm:$0xff]
    %v835 = vld [vmem:[%s824 + $0x50] sm:$0xff]
    %v836 = vld [vmem:[%s824 + $0x58] sm:$0xff]
    %v837 = vld [vmem:[%s824 + $0x60] sm:$0xff]
    %v838 = vld [vmem:[%s824 + $0x68] sm:$0xff]
    %v839 = vld [vmem:[%s824 + $0x70] sm:$0xff]
    %v840 = vld [vmem:[%s824 + $0x78] sm:$0xff]
    %v841 = vld [vmem:[%s824 + $0x80] sm:$0xff]
    %v842 = vld [vmem:[%s824 + $0x88] sm:$0xff]
    %v843 = vld [vmem:[%s824 + $0x90] sm:$0xff]
    %v844 = vld [vmem:[%s824 + $0x98] sm:$0xff]
    %v845 = vld [vmem:[%s824 + $0xa0] sm:$0xff]
    %v846 = vld [vmem:[%s824 + $0xa8] sm:$0xff]
    %v847 = vld [vmem:[%s824 + $0xb0] sm:$0xff]
    %v848 = vld [vmem:[%s824 + $0xb8] sm:$0xff]
    %v849 = vld [vmem:[%s824 + $0xc0] sm:$0xff]
    %v850 = vld [vmem:[%s824 + $0xc8] sm:$0xff]
    %v851 = vld [vmem:[%s824 + $0xd0] sm:$0xff]
    %v852 = vld [vmem:[%s824 + $0xd8] sm:$0xff]
    %v853 = vld [vmem:[%s824 + $0xe0] sm:$0xff]
    %v854 = vld [vmem:[%s824 + $0xe8] sm:$0xff]
    %v855 = vld [vmem:[%s824 + $0xf0] sm:$0xff]
    %v856 = vld [vmem:[%s824 + $0xf8] sm:$0xff]
    %v857 = vld [vmem:[%s824 + $0x100] sm:$0xff]
    %v858 = vld [vmem:[%s824 + $0x108] sm:$0xff]
    %v859 = vld [vmem:[%s824 + $0x110] sm:$0xff]
    %v860 = vld [vmem:[%s824 + $0x118] sm:$0xff]
    %v861 = vld [vmem:[%s824 + $0x120] sm:$0xff]
    %v862 = vld [vmem:[%s824 + $0x128] sm:$0xff]
    %v863 = vld [vmem:[%s824 + $0x130] sm:$0xff]
    %v864 = vld [vmem:[%s824 + $0x138] sm:$0xff]
    %v865 = vld [vmem:[%s824 + $0x140] sm:$0xff]
    %v866 = vld [vmem:[%s824 + $0x148] sm:$0xff]
    %v867 = vld [vmem:[%s824 + $0x150] sm:$0xff]
    %v868 = vld [vmem:[%s824 + $0x158] sm:$0xff]
    %v869 = vld [vmem:[%s824 + $0x160] sm:$0xff]
    %v870 = vld [vmem:[%s824 + $0x168] sm:$0xff]
    %v871 = vld [vmem:[%s824 + $0x170] sm:$0xff]
    %v872 = vld [vmem:[%s824 + $0x178] sm:$0xff]
    %v873 = vld [vmem:[%s824 + $0x180] sm:$0xff]
    %v874 = vld [vmem:[%s824 + $0x188] sm:$0xff]
    %v875 = vld [vmem:[%s824 + $0x190] sm:$0xff]
    %v876 = vld [vmem:[%s824 + $0x198] sm:$0xff]
    %v877 = vld [vmem:[%s824 + $0x1a0] sm:$0xff]
    %v878 = vld [vmem:[%s824 + $0x1a8] sm:$0xff]
    %v879 = vld [vmem:[%s824 + $0x1b0] sm:$0xff]
    %v880 = vld [vmem:[%s824 + $0x1b8] sm:$0xff]
    %v881 = vld [vmem:[%s824 + $0x1c0] sm:$0xff]
    %v882 = vld [vmem:[%s824 + $0x1c8] sm:$0xff]
    %v883 = vld [vmem:[%s824 + $0x1d0] sm:$0xff]
    %v884 = vld [vmem:[%s824 + $0x1d8] sm:$0xff]
    %v885 = vld [vmem:[%s824 + $0x1e0] sm:$0xff]
    %v886 = vld [vmem:[%s824 + $0x1e8] sm:$0xff]
    %v887 = vld [vmem:[%s824 + $0x1f0] sm:$0xff]
    %v888 = vld [vmem:[%s824 + $0x1f8] sm:$0xff]
    %s889 = scalar_lea.vmem %s4, 4
    %v890 = vld [vmem:[%s889] sm:$0xf]
    %v892 = vlaneseq
    %v893 = vshrl.u32 %v892, 7
    %v894 = vsub.s32 0, %v893
    %v895 = vrot.slane %v890, %v894
    %v896 = vlaneseq
    %v897 = vshrl.u32 %v896, 7
    %v898 = vsub.s32 1, %v897
    %v899 = vrot.slane %v890, %v898
    %v900 = vlaneseq
    %v901 = vshrl.u32 %v900, 7
    %v902 = vsub.s32 2, %v901
    %v903 = vrot.slane %v890, %v902
    %v904 = vlaneseq
    %v905 = vshrl.u32 %v904, 7
    %v906 = vsub.s32 3, %v905
    %v907 = vrot.slane %v890, %v906
    %v976 = vunpack.c.l.b16 %v825
    %v977 = vunpack.c.h.b16 %v825
    %v978 = vunpack.c.l.b16 %v826
    %v979 = vunpack.c.h.b16 %v826
    %v980 = vunpack.c.l.b16 %v827
    %v981 = vunpack.c.h.b16 %v827
    %v982 = vunpack.c.l.b16 %v828
    %v983 = vunpack.c.h.b16 %v828
    %v984 = vunpack.c.l.b16 %v829
    %v985 = vunpack.c.h.b16 %v829
    %v986 = vunpack.c.l.b16 %v830
    %v987 = vunpack.c.h.b16 %v830
    %v988 = vunpack.c.l.b16 %v831
    %v989 = vunpack.c.h.b16 %v831
    %v990 = vunpack.c.l.b16 %v832
    %v991 = vunpack.c.h.b16 %v832
    %v992 = vunpack.c.l.b16 %v833
    %v993 = vunpack.c.h.b16 %v833
    %v994 = vunpack.c.l.b16 %v834
    %v995 = vunpack.c.h.b16 %v834
    %v996 = vunpack.c.l.b16 %v835
    %v997 = vunpack.c.h.b16 %v835
    %v998 = vunpack.c.l.b16 %v836
    %v999 = vunpack.c.h.b16 %v836
    %v1000 = vunpack.c.l.b16 %v837
    %v1001 = vunpack.c.h.b16 %v837
    %v1002 = vunpack.c.l.b16 %v838
    %v1003 = vunpack.c.h.b16 %v838
    %v1004 = vunpack.c.l.b16 %v839
    %v1005 = vunpack.c.h.b16 %v839
    %v1006 = vunpack.c.l.b16 %v840
    %v1007 = vunpack.c.h.b16 %v840
    %v1008 = vunpack.c.l.b16 %v841
    %v1009 = vunpack.c.h.b16 %v841
    %v1010 = vunpack.c.l.b16 %v842
    %v1011 = vunpack.c.h.b16 %v842
    %v1012 = vunpack.c.l.b16 %v843
    %v1013 = vunpack.c.h.b16 %v843
    %v1014 = vunpack.c.l.b16 %v844
    %v1015 = vunpack.c.h.b16 %v844
    %v1016 = vunpack.c.l.b16 %v845
    %v1017 = vunpack.c.h.b16 %v845
    %v1018 = vunpack.c.l.b16 %v846
    %v1019 = vunpack.c.h.b16 %v846
    %v1020 = vunpack.c.l.b16 %v847
    %v1021 = vunpack.c.h.b16 %v847
    %v1022 = vunpack.c.l.b16 %v848
    %v1023 = vunpack.c.h.b16 %v848
    %v1024 = vunpack.c.l.b16 %v849
    %v1025 = vunpack.c.h.b16 %v849
    %v1026 = vunpack.c.l.b16 %v850
    %v1027 = vunpack.c.h.b16 %v850
    %v1028 = vunpack.c.l.b16 %v851
    %v1029 = vunpack.c.h.b16 %v851
    %v1030 = vunpack.c.l.b16 %v852
    %v1031 = vunpack.c.h.b16 %v852
    %v1032 = vunpack.c.l.b16 %v853
    %v1033 = vunpack.c.h.b16 %v853
    %v1034 = vunpack.c.l.b16 %v854
    %v1035 = vunpack.c.h.b16 %v854
    %v1036 = vunpack.c.l.b16 %v855
    %v1037 = vunpack.c.h.b16 %v855
    %v1038 = vunpack.c.l.b16 %v856
    %v1039 = vunpack.c.h.b16 %v856
    %v1040 = vunpack.c.l.b16 %v857
    %v1041 = vunpack.c.h.b16 %v857
    %v1042 = vunpack.c.l.b16 %v858
    %v1043 = vunpack.c.h.b16 %v858
    %v1044 = vunpack.c.l.b16 %v859
    %v1045 = vunpack.c.h.b16 %v859
    %v1046 = vunpack.c.l.b16 %v860
    %v1047 = vunpack.c.h.b16 %v860
    %v1048 = vunpack.c.l.b16 %v861
    %v1049 = vunpack.c.h.b16 %v861
    %v1050 = vunpack.c.l.b16 %v862
    %v1051 = vunpack.c.h.b16 %v862
    %v1052 = vunpack.c.l.b16 %v863
    %v1053 = vunpack.c.h.b16 %v863
    %v1054 = vunpack.c.l.b16 %v864
    %v1055 = vunpack.c.h.b16 %v864
    %v1056 = vunpack.c.l.b16 %v865
    %v1057 = vunpack.c.h.b16 %v865
    %v1058 = vunpack.c.l.b16 %v866
    %v1059 = vunpack.c.h.b16 %v866
    %v1060 = vunpack.c.l.b16 %v867
    %v1061 = vunpack.c.h.b16 %v867
    %v1062 = vunpack.c.l.b16 %v868
    %v1063 = vunpack.c.h.b16 %v868
    %v1064 = vunpack.c.l.b16 %v869
    %v1065 = vunpack.c.h.b16 %v869
    %v1066 = vunpack.c.l.b16 %v870
    %v1067 = vunpack.c.h.b16 %v870
    %v1068 = vunpack.c.l.b16 %v871
    %v1069 = vunpack.c.h.b16 %v871
    %v1070 = vunpack.c.l.b16 %v872
    %v1071 = vunpack.c.h.b16 %v872
    %v1072 = vunpack.c.l.b16 %v873
    %v1073 = vunpack.c.h.b16 %v873
    %v1074 = vunpack.c.l.b16 %v874
    %v1075 = vunpack.c.h.b16 %v874
    %v1076 = vunpack.c.l.b16 %v875
    %v1077 = vunpack.c.h.b16 %v875
    %v1078 = vunpack.c.l.b16 %v876
    %v1079 = vunpack.c.h.b16 %v876
    %v1080 = vunpack.c.l.b16 %v877
    %v1081 = vunpack.c.h.b16 %v877
    %v1082 = vunpack.c.l.b16 %v878
    %v1083 = vunpack.c.h.b16 %v878
    %v1084 = vunpack.c.l.b16 %v879
    %v1085 = vunpack.c.h.b16 %v879
    %v1086 = vunpack.c.l.b16 %v880
    %v1087 = vunpack.c.h.b16 %v880
    %v1088 = vunpack.c.l.b16 %v881
    %v1089 = vunpack.c.h.b16 %v881
    %v1090 = vunpack.c.l.b16 %v882
    %v1091 = vunpack.c.h.b16 %v882
    %v1092 = vunpack.c.l.b16 %v883
    %v1093 = vunpack.c.h.b16 %v883
    %v1094 = vunpack.c.l.b16 %v884
    %v1095 = vunpack.c.h.b16 %v884
    %v1096 = vunpack.c.l.b16 %v885
    %v1097 = vunpack.c.h.b16 %v885
    %v1098 = vunpack.c.l.b16 %v886
    %v1099 = vunpack.c.h.b16 %v886
    %v1100 = vunpack.c.l.b16 %v887
    %v1101 = vunpack.c.h.b16 %v887
    %v1102 = vunpack.c.l.b16 %v888
    %v1103 = vunpack.c.h.b16 %v888
    %v1104 = vpack.c.b16 %v980, %v976
    %v1105 = vpack.c.b16 %v981, %v977
    %v1106 = vpack.c.b16 %v982, %v978
    %v1107 = vpack.c.b16 %v983, %v979
    %v1108 = vpack.c.b16 %v988, %v984
    %v1109 = vpack.c.b16 %v989, %v985
    %v1110 = vpack.c.b16 %v990, %v986
    %v1111 = vpack.c.b16 %v991, %v987
    %v1112 = vpack.c.b16 %v996, %v992
    %v1113 = vpack.c.b16 %v997, %v993
    %v1114 = vpack.c.b16 %v998, %v994
    %v1115 = vpack.c.b16 %v999, %v995
    %v1116 = vpack.c.b16 %v1004, %v1000
    %v1117 = vpack.c.b16 %v1005, %v1001
    %v1118 = vpack.c.b16 %v1006, %v1002
    %v1119 = vpack.c.b16 %v1007, %v1003
    %v1120 = vpack.c.b16 %v1012, %v1008
    %v1121 = vpack.c.b16 %v1013, %v1009
    %v1122 = vpack.c.b16 %v1014, %v1010
    %v1123 = vpack.c.b16 %v1015, %v1011
    %v1124 = vpack.c.b16 %v1020, %v1016
    %v1125 = vpack.c.b16 %v1021, %v1017
    %v1126 = vpack.c.b16 %v1022, %v1018
    %v1127 = vpack.c.b16 %v1023, %v1019
    %v1128 = vpack.c.b16 %v1028, %v1024
    %v1129 = vpack.c.b16 %v1029, %v1025
    %v1130 = vpack.c.b16 %v1030, %v1026
    %v1131 = vpack.c.b16 %v1031, %v1027
    %v1132 = vpack.c.b16 %v1036, %v1032
    %v1133 = vpack.c.b16 %v1037, %v1033
    %v1134 = vpack.c.b16 %v1038, %v1034
    %v1135 = vpack.c.b16 %v1039, %v1035
    %v1136 = vpack.c.b16 %v1044, %v1040
    %v1137 = vpack.c.b16 %v1045, %v1041
    %v1138 = vpack.c.b16 %v1046, %v1042
    %v1139 = vpack.c.b16 %v1047, %v1043
    %v1140 = vpack.c.b16 %v1052, %v1048
    %v1141 = vpack.c.b16 %v1053, %v1049
    %v1142 = vpack.c.b16 %v1054, %v1050
    %v1143 = vpack.c.b16 %v1055, %v1051
    %v1144 = vpack.c.b16 %v1060, %v1056
    %v1145 = vpack.c.b16 %v1061, %v1057
    %v1146 = vpack.c.b16 %v1062, %v1058
    %v1147 = vpack.c.b16 %v1063, %v1059
    %v1148 = vpack.c.b16 %v1068, %v1064
    %v1149 = vpack.c.b16 %v1069, %v1065
    %v1150 = vpack.c.b16 %v1070, %v1066
    %v1151 = vpack.c.b16 %v1071, %v1067
    %v1152 = vpack.c.b16 %v1076, %v1072
    %v1153 = vpack.c.b16 %v1077, %v1073
    %v1154 = vpack.c.b16 %v1078, %v1074
    %v1155 = vpack.c.b16 %v1079, %v1075
    %v1156 = vpack.c.b16 %v1084, %v1080
    %v1157 = vpack.c.b16 %v1085, %v1081
    %v1158 = vpack.c.b16 %v1086, %v1082
    %v1159 = vpack.c.b16 %v1087, %v1083
    %v1160 = vpack.c.b16 %v1092, %v1088
    %v1161 = vpack.c.b16 %v1093, %v1089
    %v1162 = vpack.c.b16 %v1094, %v1090
    %v1163 = vpack.c.b16 %v1095, %v1091
    %v1164 = vpack.c.b16 %v1100, %v1096
    %v1165 = vpack.c.b16 %v1101, %v1097
    %v1166 = vpack.c.b16 %v1102, %v1098
    %v1167 = vpack.c.b16 %v1103, %v1099
    %1232 = vmatprep.subr.bf16.mxu0 %v1133
    %1233 = vmatpush1.bf16.msra.mxu0 %v1132
    %1234 = vmatprep.subr.bf16.mxu0 %v1129
    %1235 = vmatpush1.bf16.msra.mxu0 %v1128
    %1236 = vmatprep.subr.bf16.mxu0 %v1125
    %1237 = vmatpush1.bf16.msra.mxu0 %v1124
    %1238 = vmatprep.subr.bf16.mxu0 %v1121
    %1239 = vmatpush1.bf16.msra.mxu0 %v1120
    %1240 = vmatprep.subr.bf16.mxu0 %v1117
    %1241 = vmatpush1.bf16.msra.mxu0 %v1116
    %1242 = vmatprep.subr.bf16.mxu0 %v1113
    %1243 = vmatpush1.bf16.msra.mxu0 %v1112
    %1244 = vmatprep.subr.bf16.mxu0 %v1109
    %1245 = vmatpush1.bf16.msra.mxu0 %v1108
    %1246 = vmatprep.subr.bf16.mxu0 %v1105
    %1247 = vmatpush1.bf16.msra.mxu0 %v1104
    %1248 = vmatprep.subr.bf16.mxu0 %v1165
    %1249 = vmatpush2.bf16.msra.mxu0 %v1164
    %1250 = vmatprep.subr.bf16.mxu0 %v1161
    %1251 = vmatpush2.bf16.msra.mxu0 %v1160
    %1252 = vmatprep.subr.bf16.mxu0 %v1157
    %1253 = vmatpush2.bf16.msra.mxu0 %v1156
    %1254 = vmatprep.subr.bf16.mxu0 %v1153
    %1255 = vmatpush2.bf16.msra.mxu0 %v1152
    %1256 = vmatprep.subr.bf16.mxu0 %v1149
    %1257 = vmatpush2.bf16.msra.mxu0 %v1148
    %1258 = vmatprep.subr.bf16.mxu0 %v1145
    %1259 = vmatpush2.bf16.msra.mxu0 %v1144
    %1260 = vmatprep.subr.bf16.mxu0 %v1141
    %1261 = vmatpush2.bf16.msra.mxu0 %v1140
    %1262 = vmatprep.subr.bf16.mxu0 %v1137
    %1263 = vmatpush2.bf16.msra.mxu0 %v1136
    %1264 = vmatprep.mubr.bf16.mxu0 %v823
    %1265 = vmatmul.mubr.bf16.gmra.mxu0 %v822
    %v1266 = vpop.f32.mrf.mxu0
    %v1267 = vadd.f32 %v895, %v1266
    %v1268 = vpop.f32.mrf.mxu0
    %v1269 = vadd.f32 %v899, %v1268
    %v1270 = vpop.f32.mrf.mxu0
    %v1271 = vpop.f32.mrf.mxu0
    %1272 = vdwg.mxu0
    %1273 = vmatprep.subr.bf16.mxu0 %v1135
    %1274 = vmatpush1.bf16.msra.mxu0 %v1134
    %1275 = vmatprep.subr.bf16.mxu0 %v1131
    %1276 = vmatpush1.bf16.msra.mxu0 %v1130
    %1277 = vmatprep.subr.bf16.mxu0 %v1127
    %1278 = vmatpush1.bf16.msra.mxu0 %v1126
    %1279 = vmatprep.subr.bf16.mxu0 %v1123
    %1280 = vmatpush1.bf16.msra.mxu0 %v1122
    %1281 = vmatprep.subr.bf16.mxu0 %v1119
    %1282 = vmatpush1.bf16.msra.mxu0 %v1118
    %1283 = vmatprep.subr.bf16.mxu0 %v1115
    %1284 = vmatpush1.bf16.msra.mxu0 %v1114
    %1285 = vmatprep.subr.bf16.mxu0 %v1111
    %1286 = vmatpush1.bf16.msra.mxu0 %v1110
    %1287 = vmatprep.subr.bf16.mxu0 %v1107
    %1288 = vmatpush1.bf16.msra.mxu0 %v1106
    %1289 = vmatprep.subr.bf16.mxu0 %v1167
    %1290 = vmatpush2.bf16.msra.mxu0 %v1166
    %1291 = vmatprep.subr.bf16.mxu0 %v1163
    %1292 = vmatpush2.bf16.msra.mxu0 %v1162
    %1293 = vmatprep.subr.bf16.mxu0 %v1159
    %1294 = vmatpush2.bf16.msra.mxu0 %v1158
    %1295 = vmatprep.subr.bf16.mxu0 %v1155
    %1296 = vmatpush2.bf16.msra.mxu0 %v1154
    %1297 = vmatprep.subr.bf16.mxu0 %v1151
    %1298 = vmatpush2.bf16.msra.mxu0 %v1150
    %1299 = vmatprep.subr.bf16.mxu0 %v1147
    %1300 = vmatpush2.bf16.msra.mxu0 %v1146
    %1301 = vmatprep.subr.bf16.mxu0 %v1143
    %1302 = vmatpush2.bf16.msra.mxu0 %v1142
    %1303 = vmatprep.subr.bf16.mxu0 %v1139
    %1304 = vmatpush2.bf16.msra.mxu0 %v1138
    %1305 = vmatprep.mubr.bf16.mxu0 %v823
    %1306 = vmatmul.mubr.bf16.gmra.mxu0 %v822
    %v1307 = vpop.f32.mrf.mxu0
    %v1308 = vadd.f32 %v903, %v1307
    %v1309 = vpop.f32.mrf.mxu0
    %v1310 = vadd.f32 %v907, %v1309
    %v1311 = vpop.f32.mrf.mxu0
    %v1312 = vpop.f32.mrf.mxu0
    %1313 = vdwg.mxu0
    %v1314 = vxor.u32 %v1267, 2147483648
    %v1315 = vmul.f32 %v1314, 1.442695
    %v1316 = vpow.pop %v1315
    %v1317 = vadd.f32 %v1316, 1.0
    %v1318 = vrcp.pop %v1317
    %v1319 = vmul.f32 1.0, %v1318
    %v1320 = vxor.u32 %v1269, 2147483648
    %v1321 = vmul.f32 %v1320, 1.442695
    %v1322 = vpow.pop %v1321
    %v1323 = vadd.f32 %v1322, 1.0
    %v1324 = vrcp.pop %v1323
    %v1325 = vmul.f32 1.0, %v1324
    %v1326 = vtanh.pop %v1308
    %v1327 = vxor.u32 %v1310, 2147483648
    %v1328 = vmul.f32 %v1327, 1.442695
    %v1329 = vpow.pop %v1328
    %v1330 = vadd.f32 %v1329, 1.0
    %v1331 = vrcp.pop %v1330
    %v1332 = vmul.f32 1.0, %v1331
    %v1341 = vrot.slane %v789, 7
    %v1342 = vsel %vm86, %v1341, %v788
    %v1343 = vrot.slane %v790, 6
    %v1344 = vsel %vm89, %v1343, %v1342
    %v1345 = vrot.slane %v791, 5
    %v1346 = vsel %vm92, %v1345, %v1344
    %v1347 = vrot.slane %v792, 4
    %v1348 = vsel %vm95, %v1347, %v1346
    %v1349 = vrot.slane %v793, 3
    %v1350 = vsel %vm98, %v1349, %v1348
    %v1351 = vrot.slane %v794, 2
    %v1352 = vsel %vm101, %v1351, %v1350
    %v1353 = vrot.slane %v795, 1
    %v1354 = vsel %vm104, %v1353, %v1352
    %v1356 = vmul.f32 %v1325, %v1354
    %v1357 = vmul.f32 %v1319, %v1326
    %v1358 = vadd.f32 %v1356, %v1357
    %v1359 = vtanh.pop %v1358
    %v1360 = vmul.f32 %v1332, %v1359
    %v1362 = vcombine.high %v1360, %v1360
    %v1364 = vunpack.c.l.s4 1966171168
    %v1365 = vunpack.c.0.s8 %v1364
    %v1366 = vlaneseq
    %v1367 = vshrl.u32 %v1366, 7
    %v1368 = vsub.s32 %v1365, %v1367
    %v1369 = vrot.slane %v1360, %v1368
    %v1371 = vunpack.c.l.s4 1966171168
    %v1372 = vunpack.c.0.s8 %v1371
    %v1373 = vlaneseq
    %v1374 = vshrl.u32 %v1373, 7
    %v1375 = vsub.s32 %v1372, %v1374
    %v1376 = vrot.slane %v1362, %v1375
    %v1377 = vcombine.high %v1369, %v1369
    %v1378 = vcombine.high %v1376, %v1376
    %v1380 = vunpack.c.l.s4 1966171168
    %v1381 = vunpack.c.0.s8 %v1380
    %v1382 = vlaneseq
    %v1383 = vshrl.u32 %v1382, 7
    %v1384 = vsub.s32 %v1381, %v1383
    %v1385 = vrot.slane %v1369, %v1384
    %v1387 = vunpack.c.l.s4 1966171168
    %v1388 = vunpack.c.0.s8 %v1387
    %v1389 = vlaneseq
    %v1390 = vshrl.u32 %v1389, 7
    %v1391 = vsub.s32 %v1388, %v1390
    %v1392 = vrot.slane %v1376, %v1391
    %v1394 = vunpack.c.l.s4 1966171168
    %v1395 = vunpack.c.0.s8 %v1394
    %v1396 = vlaneseq
    %v1397 = vshrl.u32 %v1396, 7
    %v1398 = vsub.s32 %v1395, %v1397
    %v1399 = vrot.slane %v1377, %v1398
    %v1401 = vunpack.c.l.s4 1966171168
    %v1402 = vunpack.c.0.s8 %v1401
    %v1403 = vlaneseq
    %v1404 = vshrl.u32 %v1403, 7
    %v1405 = vsub.s32 %v1402, %v1404
    %v1406 = vrot.slane %v1378, %v1405
    %v1407 = vcombine.high %v1385, %v1385
    %v1408 = vcombine.high %v1392, %v1392
    %v1409 = vcombine.high %v1399, %v1399
    %v1410 = vcombine.high %v1406, %v1406
    %1419 = vst [vmem:[%s7 + $0x1] sm:$0x1] %v1385
    %1420 = vst [vmem:[%s7 + $0x5] sm:$0x1] %v1399
    %1421 = vst [vmem:[%s7 + $0x9] sm:$0x1] %v1407
    %1422 = vst [vmem:[%s7 + $0xd] sm:$0x1] %v1409
    %1423 = vst [vmem:[%s7 + $0x11] sm:$0x1] %v1392
    %1424 = vst [vmem:[%s7 + $0x15] sm:$0x1] %v1406
    %1425 = vst [vmem:[%s7 + $0x19] sm:$0x1] %v1408
    %1426 = vst [vmem:[%s7 + $0x1d] sm:$0x1] %v1410
    %v1428 = vcombine.high %v1358, %v1358
    %v1430 = vunpack.c.l.s4 1966171168
    %v1431 = vunpack.c.0.s8 %v1430
    %v1432 = vlaneseq
    %v1433 = vshrl.u32 %v1432, 7
    %v1434 = vsub.s32 %v1431, %v1433
    %v1435 = vrot.slane %v1358, %v1434
    %v1437 = vunpack.c.l.s4 1966171168
    %v1438 = vunpack.c.0.s8 %v1437
    %v1439 = vlaneseq
    %v1440 = vshrl.u32 %v1439, 7
    %v1441 = vsub.s32 %v1438, %v1440
    %v1442 = vrot.slane %v1428, %v1441
    %v1443 = vcombine.high %v1435, %v1435
    %v1444 = vcombine.high %v1442, %v1442
    %v1446 = vunpack.c.l.s4 1966171168
    %v1447 = vunpack.c.0.s8 %v1446
    %v1448 = vlaneseq
    %v1449 = vshrl.u32 %v1448, 7
    %v1450 = vsub.s32 %v1447, %v1449
    %v1451 = vrot.slane %v1435, %v1450
    %v1453 = vunpack.c.l.s4 1966171168
    %v1454 = vunpack.c.0.s8 %v1453
    %v1455 = vlaneseq
    %v1456 = vshrl.u32 %v1455, 7
    %v1457 = vsub.s32 %v1454, %v1456
    %v1458 = vrot.slane %v1442, %v1457
    %v1460 = vunpack.c.l.s4 1966171168
    %v1461 = vunpack.c.0.s8 %v1460
    %v1462 = vlaneseq
    %v1463 = vshrl.u32 %v1462, 7
    %v1464 = vsub.s32 %v1461, %v1463
    %v1465 = vrot.slane %v1443, %v1464
    %v1467 = vunpack.c.l.s4 1966171168
    %v1468 = vunpack.c.0.s8 %v1467
    %v1469 = vlaneseq
    %v1470 = vshrl.u32 %v1469, 7
    %v1471 = vsub.s32 %v1468, %v1470
    %v1472 = vrot.slane %v1444, %v1471
    %v1473 = vcombine.high %v1451, %v1451
    %v1474 = vcombine.high %v1458, %v1458
    %v1475 = vcombine.high %v1465, %v1465
    %v1476 = vcombine.high %v1472, %v1472
    %1485 = vst [vmem:[%s8 + $0x1] sm:$0x1] %v1451
    %1486 = vst [vmem:[%s8 + $0x5] sm:$0x1] %v1465
    %1487 = vst [vmem:[%s8 + $0x9] sm:$0x1] %v1473
    %1488 = vst [vmem:[%s8 + $0xd] sm:$0x1] %v1475
    %1489 = vst [vmem:[%s8 + $0x11] sm:$0x1] %v1458
    %1490 = vst [vmem:[%s8 + $0x15] sm:$0x1] %v1472
    %1491 = vst [vmem:[%s8 + $0x19] sm:$0x1] %v1474
    %1492 = vst [vmem:[%s8 + $0x1d] sm:$0x1] %v1476
    %v1493 = vld [vmem:[#allocation2] sm:$0xff]
    %v1494 = vadd.f32 %v1493, %v1360
    %1495 = vst [vmem:[#allocation2] sm:$0xff] %v1494
    %v1496 = vld [vmem:[%s1 + $0x2] sm:$0x1]
    %v1497 = vld [vmem:[%s1 + $0x6] sm:$0x1]
    %v1498 = vld [vmem:[%s1 + $0xa] sm:$0x1]
    %v1499 = vld [vmem:[%s1 + $0xe] sm:$0x1]
    %v1500 = vld [vmem:[%s1 + $0x12] sm:$0x1]
    %v1501 = vld [vmem:[%s1 + $0x16] sm:$0x1]
    %v1502 = vld [vmem:[%s1 + $0x1a] sm:$0x1]
    %v1503 = vld [vmem:[%s1 + $0x1e] sm:$0x1]
    %v1504 = vld [vmem:[%s2 + $0x2] sm:$0x1]
    %v1505 = vld [vmem:[%s2 + $0x6] sm:$0x1]
    %v1506 = vld [vmem:[%s2 + $0xa] sm:$0x1]
    %v1507 = vld [vmem:[%s2 + $0xe] sm:$0x1]
    %v1508 = vld [vmem:[%s2 + $0x12] sm:$0x1]
    %v1509 = vld [vmem:[%s2 + $0x16] sm:$0x1]
    %v1510 = vld [vmem:[%s2 + $0x1a] sm:$0x1]
    %v1511 = vld [vmem:[%s2 + $0x1e] sm:$0x1]
    %v1520 = vrot.slane %v1497, 7
    %v1521 = vsel %vm86, %v1520, %v1496
    %v1522 = vrot.slane %v1498, 6
    %v1523 = vsel %vm89, %v1522, %v1521
    %v1524 = vrot.slane %v1499, 5
    %v1525 = vsel %vm92, %v1524, %v1523
    %v1526 = vrot.slane %v1500, 4
    %v1527 = vsel %vm95, %v1526, %v1525
    %v1528 = vrot.slane %v1501, 3
    %v1529 = vsel %vm98, %v1528, %v1527
    %v1530 = vrot.slane %v1502, 2
    %v1531 = vsel %vm101, %v1530, %v1529
    %v1532 = vrot.slane %v1503, 1
    %v1533 = vsel %vm104, %v1532, %v1531
    %1535 = vst [vmem:[#allocation2 + $0x8] sm:$0xff] %v1533
    %v1536 = vld [vmem:[#allocation2] sm:$0xff]
    %v1537 = vld [vmem:[#allocation2 + $0x8] sm:$0xff]
    %v1538 = vpack.c.bf16 %v1536, %v1536
    %v1539 = vpack.c.bf16 %v1537, %v1537
    %s1540 = scalar_lea.vmem [#allocation3], 1024
    %v1541 = vld [vmem:[%s1540] sm:$0xff]
    %v1542 = vld [vmem:[%s1540 + $0x8] sm:$0xff]
    %v1543 = vld [vmem:[%s1540 + $0x10] sm:$0xff]
    %v1544 = vld [vmem:[%s1540 + $0x18] sm:$0xff]
    %v1545 = vld [vmem:[%s1540 + $0x20] sm:$0xff]
    %v1546 = vld [vmem:[%s1540 + $0x28] sm:$0xff]
    %v1547 = vld [vmem:[%s1540 + $0x30] sm:$0xff]
    %v1548 = vld [vmem:[%s1540 + $0x38] sm:$0xff]
    %v1549 = vld [vmem:[%s1540 + $0x40] sm:$0xff]
    %v1550 = vld [vmem:[%s1540 + $0x48] sm:$0xff]
    %v1551 = vld [vmem:[%s1540 + $0x50] sm:$0xff]
    %v1552 = vld [vmem:[%s1540 + $0x58] sm:$0xff]
    %v1553 = vld [vmem:[%s1540 + $0x60] sm:$0xff]
    %v1554 = vld [vmem:[%s1540 + $0x68] sm:$0xff]
    %v1555 = vld [vmem:[%s1540 + $0x70] sm:$0xff]
    %v1556 = vld [vmem:[%s1540 + $0x78] sm:$0xff]
    %v1557 = vld [vmem:[%s1540 + $0x80] sm:$0xff]
    %v1558 = vld [vmem:[%s1540 + $0x88] sm:$0xff]
    %v1559 = vld [vmem:[%s1540 + $0x90] sm:$0xff]
    %v1560 = vld [vmem:[%s1540 + $0x98] sm:$0xff]
    %v1561 = vld [vmem:[%s1540 + $0xa0] sm:$0xff]
    %v1562 = vld [vmem:[%s1540 + $0xa8] sm:$0xff]
    %v1563 = vld [vmem:[%s1540 + $0xb0] sm:$0xff]
    %v1564 = vld [vmem:[%s1540 + $0xb8] sm:$0xff]
    %v1565 = vld [vmem:[%s1540 + $0xc0] sm:$0xff]
    %v1566 = vld [vmem:[%s1540 + $0xc8] sm:$0xff]
    %v1567 = vld [vmem:[%s1540 + $0xd0] sm:$0xff]
    %v1568 = vld [vmem:[%s1540 + $0xd8] sm:$0xff]
    %v1569 = vld [vmem:[%s1540 + $0xe0] sm:$0xff]
    %v1570 = vld [vmem:[%s1540 + $0xe8] sm:$0xff]
    %v1571 = vld [vmem:[%s1540 + $0xf0] sm:$0xff]
    %v1572 = vld [vmem:[%s1540 + $0xf8] sm:$0xff]
    %v1573 = vld [vmem:[%s1540 + $0x100] sm:$0xff]
    %v1574 = vld [vmem:[%s1540 + $0x108] sm:$0xff]
    %v1575 = vld [vmem:[%s1540 + $0x110] sm:$0xff]
    %v1576 = vld [vmem:[%s1540 + $0x118] sm:$0xff]
    %v1577 = vld [vmem:[%s1540 + $0x120] sm:$0xff]
    %v1578 = vld [vmem:[%s1540 + $0x128] sm:$0xff]
    %v1579 = vld [vmem:[%s1540 + $0x130] sm:$0xff]
    %v1580 = vld [vmem:[%s1540 + $0x138] sm:$0xff]
    %v1581 = vld [vmem:[%s1540 + $0x140] sm:$0xff]
    %v1582 = vld [vmem:[%s1540 + $0x148] sm:$0xff]
    %v1583 = vld [vmem:[%s1540 + $0x150] sm:$0xff]
    %v1584 = vld [vmem:[%s1540 + $0x158] sm:$0xff]
    %v1585 = vld [vmem:[%s1540 + $0x160] sm:$0xff]
    %v1586 = vld [vmem:[%s1540 + $0x168] sm:$0xff]
    %v1587 = vld [vmem:[%s1540 + $0x170] sm:$0xff]
    %v1588 = vld [vmem:[%s1540 + $0x178] sm:$0xff]
    %v1589 = vld [vmem:[%s1540 + $0x180] sm:$0xff]
    %v1590 = vld [vmem:[%s1540 + $0x188] sm:$0xff]
    %v1591 = vld [vmem:[%s1540 + $0x190] sm:$0xff]
    %v1592 = vld [vmem:[%s1540 + $0x198] sm:$0xff]
    %v1593 = vld [vmem:[%s1540 + $0x1a0] sm:$0xff]
    %v1594 = vld [vmem:[%s1540 + $0x1a8] sm:$0xff]
    %v1595 = vld [vmem:[%s1540 + $0x1b0] sm:$0xff]
    %v1596 = vld [vmem:[%s1540 + $0x1b8] sm:$0xff]
    %v1597 = vld [vmem:[%s1540 + $0x1c0] sm:$0xff]
    %v1598 = vld [vmem:[%s1540 + $0x1c8] sm:$0xff]
    %v1599 = vld [vmem:[%s1540 + $0x1d0] sm:$0xff]
    %v1600 = vld [vmem:[%s1540 + $0x1d8] sm:$0xff]
    %v1601 = vld [vmem:[%s1540 + $0x1e0] sm:$0xff]
    %v1602 = vld [vmem:[%s1540 + $0x1e8] sm:$0xff]
    %v1603 = vld [vmem:[%s1540 + $0x1f0] sm:$0xff]
    %v1604 = vld [vmem:[%s1540 + $0x1f8] sm:$0xff]
    %s1605 = scalar_lea.vmem %s4, 8
    %v1606 = vld [vmem:[%s1605] sm:$0xf]
    %v1608 = vlaneseq
    %v1609 = vshrl.u32 %v1608, 7
    %v1610 = vsub.s32 0, %v1609
    %v1611 = vrot.slane %v1606, %v1610
    %v1612 = vlaneseq
    %v1613 = vshrl.u32 %v1612, 7
    %v1614 = vsub.s32 1, %v1613
    %v1615 = vrot.slane %v1606, %v1614
    %v1616 = vlaneseq
    %v1617 = vshrl.u32 %v1616, 7
    %v1618 = vsub.s32 2, %v1617
    %v1619 = vrot.slane %v1606, %v1618
    %v1620 = vlaneseq
    %v1621 = vshrl.u32 %v1620, 7
    %v1622 = vsub.s32 3, %v1621
    %v1623 = vrot.slane %v1606, %v1622
    %v1692 = vunpack.c.l.b16 %v1541
    %v1693 = vunpack.c.h.b16 %v1541
    %v1694 = vunpack.c.l.b16 %v1542
    %v1695 = vunpack.c.h.b16 %v1542
    %v1696 = vunpack.c.l.b16 %v1543
    %v1697 = vunpack.c.h.b16 %v1543
    %v1698 = vunpack.c.l.b16 %v1544
    %v1699 = vunpack.c.h.b16 %v1544
    %v1700 = vunpack.c.l.b16 %v1545
    %v1701 = vunpack.c.h.b16 %v1545
    %v1702 = vunpack.c.l.b16 %v1546
    %v1703 = vunpack.c.h.b16 %v1546
    %v1704 = vunpack.c.l.b16 %v1547
    %v1705 = vunpack.c.h.b16 %v1547
    %v1706 = vunpack.c.l.b16 %v1548
    %v1707 = vunpack.c.h.b16 %v1548
    %v1708 = vunpack.c.l.b16 %v1549
    %v1709 = vunpack.c.h.b16 %v1549
    %v1710 = vunpack.c.l.b16 %v1550
    %v1711 = vunpack.c.h.b16 %v1550
    %v1712 = vunpack.c.l.b16 %v1551
    %v1713 = vunpack.c.h.b16 %v1551
    %v1714 = vunpack.c.l.b16 %v1552
    %v1715 = vunpack.c.h.b16 %v1552
    %v1716 = vunpack.c.l.b16 %v1553
    %v1717 = vunpack.c.h.b16 %v1553
    %v1718 = vunpack.c.l.b16 %v1554
    %v1719 = vunpack.c.h.b16 %v1554
    %v1720 = vunpack.c.l.b16 %v1555
    %v1721 = vunpack.c.h.b16 %v1555
    %v1722 = vunpack.c.l.b16 %v1556
    %v1723 = vunpack.c.h.b16 %v1556
    %v1724 = vunpack.c.l.b16 %v1557
    %v1725 = vunpack.c.h.b16 %v1557
    %v1726 = vunpack.c.l.b16 %v1558
    %v1727 = vunpack.c.h.b16 %v1558
    %v1728 = vunpack.c.l.b16 %v1559
    %v1729 = vunpack.c.h.b16 %v1559
    %v1730 = vunpack.c.l.b16 %v1560
    %v1731 = vunpack.c.h.b16 %v1560
    %v1732 = vunpack.c.l.b16 %v1561
    %v1733 = vunpack.c.h.b16 %v1561
    %v1734 = vunpack.c.l.b16 %v1562
    %v1735 = vunpack.c.h.b16 %v1562
    %v1736 = vunpack.c.l.b16 %v1563
    %v1737 = vunpack.c.h.b16 %v1563
    %v1738 = vunpack.c.l.b16 %v1564
    %v1739 = vunpack.c.h.b16 %v1564
    %v1740 = vunpack.c.l.b16 %v1565
    %v1741 = vunpack.c.h.b16 %v1565
    %v1742 = vunpack.c.l.b16 %v1566
    %v1743 = vunpack.c.h.b16 %v1566
    %v1744 = vunpack.c.l.b16 %v1567
    %v1745 = vunpack.c.h.b16 %v1567
    %v1746 = vunpack.c.l.b16 %v1568
    %v1747 = vunpack.c.h.b16 %v1568
    %v1748 = vunpack.c.l.b16 %v1569
    %v1749 = vunpack.c.h.b16 %v1569
    %v1750 = vunpack.c.l.b16 %v1570
    %v1751 = vunpack.c.h.b16 %v1570
    %v1752 = vunpack.c.l.b16 %v1571
    %v1753 = vunpack.c.h.b16 %v1571
    %v1754 = vunpack.c.l.b16 %v1572
    %v1755 = vunpack.c.h.b16 %v1572
    %v1756 = vunpack.c.l.b16 %v1573
    %v1757 = vunpack.c.h.b16 %v1573
    %v1758 = vunpack.c.l.b16 %v1574
    %v1759 = vunpack.c.h.b16 %v1574
    %v1760 = vunpack.c.l.b16 %v1575
    %v1761 = vunpack.c.h.b16 %v1575
    %v1762 = vunpack.c.l.b16 %v1576
    %v1763 = vunpack.c.h.b16 %v1576
    %v1764 = vunpack.c.l.b16 %v1577
    %v1765 = vunpack.c.h.b16 %v1577
    %v1766 = vunpack.c.l.b16 %v1578
    %v1767 = vunpack.c.h.b16 %v1578
    %v1768 = vunpack.c.l.b16 %v1579
    %v1769 = vunpack.c.h.b16 %v1579
    %v1770 = vunpack.c.l.b16 %v1580
    %v1771 = vunpack.c.h.b16 %v1580
    %v1772 = vunpack.c.l.b16 %v1581
    %v1773 = vunpack.c.h.b16 %v1581
    %v1774 = vunpack.c.l.b16 %v1582
    %v1775 = vunpack.c.h.b16 %v1582
    %v1776 = vunpack.c.l.b16 %v1583
    %v1777 = vunpack.c.h.b16 %v1583
    %v1778 = vunpack.c.l.b16 %v1584
    %v1779 = vunpack.c.h.b16 %v1584
    %v1780 = vunpack.c.l.b16 %v1585
    %v1781 = vunpack.c.h.b16 %v1585
    %v1782 = vunpack.c.l.b16 %v1586
    %v1783 = vunpack.c.h.b16 %v1586
    %v1784 = vunpack.c.l.b16 %v1587
    %v1785 = vunpack.c.h.b16 %v1587
    %v1786 = vunpack.c.l.b16 %v1588
    %v1787 = vunpack.c.h.b16 %v1588
    %v1788 = vunpack.c.l.b16 %v1589
    %v1789 = vunpack.c.h.b16 %v1589
    %v1790 = vunpack.c.l.b16 %v1590
    %v1791 = vunpack.c.h.b16 %v1590
    %v1792 = vunpack.c.l.b16 %v1591
    %v1793 = vunpack.c.h.b16 %v1591
    %v1794 = vunpack.c.l.b16 %v1592
    %v1795 = vunpack.c.h.b16 %v1592
    %v1796 = vunpack.c.l.b16 %v1593
    %v1797 = vunpack.c.h.b16 %v1593
    %v1798 = vunpack.c.l.b16 %v1594
    %v1799 = vunpack.c.h.b16 %v1594
    %v1800 = vunpack.c.l.b16 %v1595
    %v1801 = vunpack.c.h.b16 %v1595
    %v1802 = vunpack.c.l.b16 %v1596
    %v1803 = vunpack.c.h.b16 %v1596
    %v1804 = vunpack.c.l.b16 %v1597
    %v1805 = vunpack.c.h.b16 %v1597
    %v1806 = vunpack.c.l.b16 %v1598
    %v1807 = vunpack.c.h.b16 %v1598
    %v1808 = vunpack.c.l.b16 %v1599
    %v1809 = vunpack.c.h.b16 %v1599
    %v1810 = vunpack.c.l.b16 %v1600
    %v1811 = vunpack.c.h.b16 %v1600
    %v1812 = vunpack.c.l.b16 %v1601
    %v1813 = vunpack.c.h.b16 %v1601
    %v1814 = vunpack.c.l.b16 %v1602
    %v1815 = vunpack.c.h.b16 %v1602
    %v1816 = vunpack.c.l.b16 %v1603
    %v1817 = vunpack.c.h.b16 %v1603
    %v1818 = vunpack.c.l.b16 %v1604
    %v1819 = vunpack.c.h.b16 %v1604
    %v1820 = vpack.c.b16 %v1696, %v1692
    %v1821 = vpack.c.b16 %v1697, %v1693
    %v1822 = vpack.c.b16 %v1698, %v1694
    %v1823 = vpack.c.b16 %v1699, %v1695
    %v1824 = vpack.c.b16 %v1704, %v1700
    %v1825 = vpack.c.b16 %v1705, %v1701
    %v1826 = vpack.c.b16 %v1706, %v1702
    %v1827 = vpack.c.b16 %v1707, %v1703
    %v1828 = vpack.c.b16 %v1712, %v1708
    %v1829 = vpack.c.b16 %v1713, %v1709
    %v1830 = vpack.c.b16 %v1714, %v1710
    %v1831 = vpack.c.b16 %v1715, %v1711
    %v1832 = vpack.c.b16 %v1720, %v1716
    %v1833 = vpack.c.b16 %v1721, %v1717
    %v1834 = vpack.c.b16 %v1722, %v1718
    %v1835 = vpack.c.b16 %v1723, %v1719
    %v1836 = vpack.c.b16 %v1728, %v1724
    %v1837 = vpack.c.b16 %v1729, %v1725
    %v1838 = vpack.c.b16 %v1730, %v1726
    %v1839 = vpack.c.b16 %v1731, %v1727
    %v1840 = vpack.c.b16 %v1736, %v1732
    %v1841 = vpack.c.b16 %v1737, %v1733
    %v1842 = vpack.c.b16 %v1738, %v1734
    %v1843 = vpack.c.b16 %v1739, %v1735
    %v1844 = vpack.c.b16 %v1744, %v1740
    %v1845 = vpack.c.b16 %v1745, %v1741
    %v1846 = vpack.c.b16 %v1746, %v1742
    %v1847 = vpack.c.b16 %v1747, %v1743
    %v1848 = vpack.c.b16 %v1752, %v1748
    %v1849 = vpack.c.b16 %v1753, %v1749
    %v1850 = vpack.c.b16 %v1754, %v1750
    %v1851 = vpack.c.b16 %v1755, %v1751
    %v1852 = vpack.c.b16 %v1760, %v1756
    %v1853 = vpack.c.b16 %v1761, %v1757
    %v1854 = vpack.c.b16 %v1762, %v1758
    %v1855 = vpack.c.b16 %v1763, %v1759
    %v1856 = vpack.c.b16 %v1768, %v1764
    %v1857 = vpack.c.b16 %v1769, %v1765
    %v1858 = vpack.c.b16 %v1770, %v1766
    %v1859 = vpack.c.b16 %v1771, %v1767
    %v1860 = vpack.c.b16 %v1776, %v1772
    %v1861 = vpack.c.b16 %v1777, %v1773
    %v1862 = vpack.c.b16 %v1778, %v1774
    %v1863 = vpack.c.b16 %v1779, %v1775
    %v1864 = vpack.c.b16 %v1784, %v1780
    %v1865 = vpack.c.b16 %v1785, %v1781
    %v1866 = vpack.c.b16 %v1786, %v1782
    %v1867 = vpack.c.b16 %v1787, %v1783
    %v1868 = vpack.c.b16 %v1792, %v1788
    %v1869 = vpack.c.b16 %v1793, %v1789
    %v1870 = vpack.c.b16 %v1794, %v1790
    %v1871 = vpack.c.b16 %v1795, %v1791
    %v1872 = vpack.c.b16 %v1800, %v1796
    %v1873 = vpack.c.b16 %v1801, %v1797
    %v1874 = vpack.c.b16 %v1802, %v1798
    %v1875 = vpack.c.b16 %v1803, %v1799
    %v1876 = vpack.c.b16 %v1808, %v1804
    %v1877 = vpack.c.b16 %v1809, %v1805
    %v1878 = vpack.c.b16 %v1810, %v1806
    %v1879 = vpack.c.b16 %v1811, %v1807
    %v1880 = vpack.c.b16 %v1816, %v1812
    %v1881 = vpack.c.b16 %v1817, %v1813
    %v1882 = vpack.c.b16 %v1818, %v1814
    %v1883 = vpack.c.b16 %v1819, %v1815
    %1948 = vmatprep.subr.bf16.mxu0 %v1849
    %1949 = vmatpush1.bf16.msra.mxu0 %v1848
    %1950 = vmatprep.subr.bf16.mxu0 %v1845
    %1951 = vmatpush1.bf16.msra.mxu0 %v1844
    %1952 = vmatprep.subr.bf16.mxu0 %v1841
    %1953 = vmatpush1.bf16.msra.mxu0 %v1840
    %1954 = vmatprep.subr.bf16.mxu0 %v1837
    %1955 = vmatpush1.bf16.msra.mxu0 %v1836
    %1956 = vmatprep.subr.bf16.mxu0 %v1833
    %1957 = vmatpush1.bf16.msra.mxu0 %v1832
    %1958 = vmatprep.subr.bf16.mxu0 %v1829
    %1959 = vmatpush1.bf16.msra.mxu0 %v1828
    %1960 = vmatprep.subr.bf16.mxu0 %v1825
    %1961 = vmatpush1.bf16.msra.mxu0 %v1824
    %1962 = vmatprep.subr.bf16.mxu0 %v1821
    %1963 = vmatpush1.bf16.msra.mxu0 %v1820
    %1964 = vmatprep.subr.bf16.mxu0 %v1881
    %1965 = vmatpush2.bf16.msra.mxu0 %v1880
    %1966 = vmatprep.subr.bf16.mxu0 %v1877
    %1967 = vmatpush2.bf16.msra.mxu0 %v1876
    %1968 = vmatprep.subr.bf16.mxu0 %v1873
    %1969 = vmatpush2.bf16.msra.mxu0 %v1872
    %1970 = vmatprep.subr.bf16.mxu0 %v1869
    %1971 = vmatpush2.bf16.msra.mxu0 %v1868
    %1972 = vmatprep.subr.bf16.mxu0 %v1865
    %1973 = vmatpush2.bf16.msra.mxu0 %v1864
    %1974 = vmatprep.subr.bf16.mxu0 %v1861
    %1975 = vmatpush2.bf16.msra.mxu0 %v1860
    %1976 = vmatprep.subr.bf16.mxu0 %v1857
    %1977 = vmatpush2.bf16.msra.mxu0 %v1856
    %1978 = vmatprep.subr.bf16.mxu0 %v1853
    %1979 = vmatpush2.bf16.msra.mxu0 %v1852
    %1980 = vmatprep.mubr.bf16.mxu0 %v1539
    %1981 = vmatmul.mubr.bf16.gmra.mxu0 %v1538
    %v1982 = vpop.f32.mrf.mxu0
    %v1983 = vadd.f32 %v1611, %v1982
    %v1984 = vpop.f32.mrf.mxu0
    %v1985 = vadd.f32 %v1615, %v1984
    %v1986 = vpop.f32.mrf.mxu0
    %v1987 = vpop.f32.mrf.mxu0
    %1988 = vdwg.mxu0
    %1989 = vmatprep.subr.bf16.mxu0 %v1851
    %1990 = vmatpush1.bf16.msra.mxu0 %v1850
    %1991 = vmatprep.subr.bf16.mxu0 %v1847
    %1992 = vmatpush1.bf16.msra.mxu0 %v1846
    %1993 = vmatprep.subr.bf16.mxu0 %v1843
    %1994 = vmatpush1.bf16.msra.mxu0 %v1842
    %1995 = vmatprep.subr.bf16.mxu0 %v1839
    %1996 = vmatpush1.bf16.msra.mxu0 %v1838
    %1997 = vmatprep.subr.bf16.mxu0 %v1835
    %1998 = vmatpush1.bf16.msra.mxu0 %v1834
    %1999 = vmatprep.subr.bf16.mxu0 %v1831
    %2000 = vmatpush1.bf16.msra.mxu0 %v1830
    %2001 = vmatprep.subr.bf16.mxu0 %v1827
    %2002 = vmatpush1.bf16.msra.mxu0 %v1826
    %2003 = vmatprep.subr.bf16.mxu0 %v1823
    %2004 = vmatpush1.bf16.msra.mxu0 %v1822
    %2005 = vmatprep.subr.bf16.mxu0 %v1883
    %2006 = vmatpush2.bf16.msra.mxu0 %v1882
    %2007 = vmatprep.subr.bf16.mxu0 %v1879
    %2008 = vmatpush2.bf16.msra.mxu0 %v1878
    %2009 = vmatprep.subr.bf16.mxu0 %v1875
    %2010 = vmatpush2.bf16.msra.mxu0 %v1874
    %2011 = vmatprep.subr.bf16.mxu0 %v1871
    %2012 = vmatpush2.bf16.msra.mxu0 %v1870
    %2013 = vmatprep.subr.bf16.mxu0 %v1867
    %2014 = vmatpush2.bf16.msra.mxu0 %v1866
    %2015 = vmatprep.subr.bf16.mxu0 %v1863
    %2016 = vmatpush2.bf16.msra.mxu0 %v1862
    %2017 = vmatprep.subr.bf16.mxu0 %v1859
    %2018 = vmatpush2.bf16.msra.mxu0 %v1858
    %2019 = vmatprep.subr.bf16.mxu0 %v1855
    %2020 = vmatpush2.bf16.msra.mxu0 %v1854
    %2021 = vmatprep.mubr.bf16.mxu0 %v1539
    %2022 = vmatmul.mubr.bf16.gmra.mxu0 %v1538
    %v2023 = vpop.f32.mrf.mxu0
    %v2024 = vadd.f32 %v1619, %v2023
    %v2025 = vpop.f32.mrf.mxu0
    %v2026 = vadd.f32 %v1623, %v2025
    %v2027 = vpop.f32.mrf.mxu0
    %v2028 = vpop.f32.mrf.mxu0
    %2029 = vdwg.mxu0
    %v2030 = vxor.u32 %v1983, 2147483648
    %v2031 = vmul.f32 %v2030, 1.442695
    %v2032 = vpow.pop %v2031
    %v2033 = vadd.f32 %v2032, 1.0
    %v2034 = vrcp.pop %v2033
    %v2035 = vmul.f32 1.0, %v2034
    %v2036 = vxor.u32 %v1985, 2147483648
    %v2037 = vmul.f32 %v2036, 1.442695
    %v2038 = vpow.pop %v2037
    %v2039 = vadd.f32 %v2038, 1.0
    %v2040 = vrcp.pop %v2039
    %v2041 = vmul.f32 1.0, %v2040
    %v2042 = vtanh.pop %v2024
    %v2043 = vxor.u32 %v2026, 2147483648
    %v2044 = vmul.f32 %v2043, 1.442695
    %v2045 = vpow.pop %v2044
    %v2046 = vadd.f32 %v2045, 1.0
    %v2047 = vrcp.pop %v2046
    %v2048 = vmul.f32 1.0, %v2047
    %v2057 = vrot.slane %v1505, 7
    %v2058 = vsel %vm86, %v2057, %v1504
    %v2059 = vrot.slane %v1506, 6
    %v2060 = vsel %vm89, %v2059, %v2058
    %v2061 = vrot.slane %v1507, 5
    %v2062 = vsel %vm92, %v2061, %v2060
    %v2063 = vrot.slane %v1508, 4
    %v2064 = vsel %vm95, %v2063, %v2062
    %v2065 = vrot.slane %v1509, 3
    %v2066 = vsel %vm98, %v2065, %v2064
    %v2067 = vrot.slane %v1510, 2
    %v2068 = vsel %vm101, %v2067, %v2066
    %v2069 = vrot.slane %v1511, 1
    %v2070 = vsel %vm104, %v2069, %v2068
    %v2072 = vmul.f32 %v2041, %v2070
    %v2073 = vmul.f32 %v2035, %v2042
    %v2074 = vadd.f32 %v2072, %v2073
    %v2075 = vtanh.pop %v2074
    %v2076 = vmul.f32 %v2048, %v2075
    %v2078 = vcombine.high %v2076, %v2076
    %v2080 = vunpack.c.l.s4 1966171168
    %v2081 = vunpack.c.0.s8 %v2080
    %v2082 = vlaneseq
    %v2083 = vshrl.u32 %v2082, 7
    %v2084 = vsub.s32 %v2081, %v2083
    %v2085 = vrot.slane %v2076, %v2084
    %v2087 = vunpack.c.l.s4 1966171168
    %v2088 = vunpack.c.0.s8 %v2087
    %v2089 = vlaneseq
    %v2090 = vshrl.u32 %v2089, 7
    %v2091 = vsub.s32 %v2088, %v2090
    %v2092 = vrot.slane %v2078, %v2091
    %v2093 = vcombine.high %v2085, %v2085
    %v2094 = vcombine.high %v2092, %v2092
    %v2096 = vunpack.c.l.s4 1966171168
    %v2097 = vunpack.c.0.s8 %v2096
    %v2098 = vlaneseq
    %v2099 = vshrl.u32 %v2098, 7
    %v2100 = vsub.s32 %v2097, %v2099
    %v2101 = vrot.slane %v2085, %v2100
    %v2103 = vunpack.c.l.s4 1966171168
    %v2104 = vunpack.c.0.s8 %v2103
    %v2105 = vlaneseq
    %v2106 = vshrl.u32 %v2105, 7
    %v2107 = vsub.s32 %v2104, %v2106
    %v2108 = vrot.slane %v2092, %v2107
    %v2110 = vunpack.c.l.s4 1966171168
    %v2111 = vunpack.c.0.s8 %v2110
    %v2112 = vlaneseq
    %v2113 = vshrl.u32 %v2112, 7
    %v2114 = vsub.s32 %v2111, %v2113
    %v2115 = vrot.slane %v2093, %v2114
    %v2117 = vunpack.c.l.s4 1966171168
    %v2118 = vunpack.c.0.s8 %v2117
    %v2119 = vlaneseq
    %v2120 = vshrl.u32 %v2119, 7
    %v2121 = vsub.s32 %v2118, %v2120
    %v2122 = vrot.slane %v2094, %v2121
    %v2123 = vcombine.high %v2101, %v2101
    %v2124 = vcombine.high %v2108, %v2108
    %v2125 = vcombine.high %v2115, %v2115
    %v2126 = vcombine.high %v2122, %v2122
    %2135 = vst [vmem:[%s7 + $0x2] sm:$0x1] %v2101
    %2136 = vst [vmem:[%s7 + $0x6] sm:$0x1] %v2115
    %2137 = vst [vmem:[%s7 + $0xa] sm:$0x1] %v2123
    %2138 = vst [vmem:[%s7 + $0xe] sm:$0x1] %v2125
    %2139 = vst [vmem:[%s7 + $0x12] sm:$0x1] %v2108
    %2140 = vst [vmem:[%s7 + $0x16] sm:$0x1] %v2122
    %2141 = vst [vmem:[%s7 + $0x1a] sm:$0x1] %v2124
    %2142 = vst [vmem:[%s7 + $0x1e] sm:$0x1] %v2126
    %v2144 = vcombine.high %v2074, %v2074
    %v2146 = vunpack.c.l.s4 1966171168
    %v2147 = vunpack.c.0.s8 %v2146
    %v2148 = vlaneseq
    %v2149 = vshrl.u32 %v2148, 7
    %v2150 = vsub.s32 %v2147, %v2149
    %v2151 = vrot.slane %v2074, %v2150
    %v2153 = vunpack.c.l.s4 1966171168
    %v2154 = vunpack.c.0.s8 %v2153
    %v2155 = vlaneseq
    %v2156 = vshrl.u32 %v2155, 7
    %v2157 = vsub.s32 %v2154, %v2156
    %v2158 = vrot.slane %v2144, %v2157
    %v2159 = vcombine.high %v2151, %v2151
    %v2160 = vcombine.high %v2158, %v2158
    %v2162 = vunpack.c.l.s4 1966171168
    %v2163 = vunpack.c.0.s8 %v2162
    %v2164 = vlaneseq
    %v2165 = vshrl.u32 %v2164, 7
    %v2166 = vsub.s32 %v2163, %v2165
    %v2167 = vrot.slane %v2151, %v2166
    %v2169 = vunpack.c.l.s4 1966171168
    %v2170 = vunpack.c.0.s8 %v2169
    %v2171 = vlaneseq
    %v2172 = vshrl.u32 %v2171, 7
    %v2173 = vsub.s32 %v2170, %v2172
    %v2174 = vrot.slane %v2158, %v2173
    %v2176 = vunpack.c.l.s4 1966171168
    %v2177 = vunpack.c.0.s8 %v2176
    %v2178 = vlaneseq
    %v2179 = vshrl.u32 %v2178, 7
    %v2180 = vsub.s32 %v2177, %v2179
    %v2181 = vrot.slane %v2159, %v2180
    %v2183 = vunpack.c.l.s4 1966171168
    %v2184 = vunpack.c.0.s8 %v2183
    %v2185 = vlaneseq
    %v2186 = vshrl.u32 %v2185, 7
    %v2187 = vsub.s32 %v2184, %v2186
    %v2188 = vrot.slane %v2160, %v2187
    %v2189 = vcombine.high %v2167, %v2167
    %v2190 = vcombine.high %v2174, %v2174
    %v2191 = vcombine.high %v2181, %v2181
    %v2192 = vcombine.high %v2188, %v2188
    %2201 = vst [vmem:[%s8 + $0x2] sm:$0x1] %v2167
    %2202 = vst [vmem:[%s8 + $0x6] sm:$0x1] %v2181
    %2203 = vst [vmem:[%s8 + $0xa] sm:$0x1] %v2189
    %2204 = vst [vmem:[%s8 + $0xe] sm:$0x1] %v2191
    %2205 = vst [vmem:[%s8 + $0x12] sm:$0x1] %v2174
    %2206 = vst [vmem:[%s8 + $0x16] sm:$0x1] %v2188
    %2207 = vst [vmem:[%s8 + $0x1a] sm:$0x1] %v2190
    %2208 = vst [vmem:[%s8 + $0x1e] sm:$0x1] %v2192
    %v2209 = vld [vmem:[#allocation2] sm:$0xff]
    %v2210 = vadd.f32 %v2209, %v2076
    %2211 = vst [vmem:[#allocation2] sm:$0xff] %v2210
    %v2212 = vld [vmem:[#allocation2] sm:$0xff]
    %v2213 = vpack.c.bf16 %v2212, %v2212
    %v2214 = vld [vmem:[#allocation6] sm:$0xff]
    %v2215 = vld [vmem:[#allocation6 + $0x8] sm:$0xff]
    %v2216 = vld [vmem:[#allocation6 + $0x10] sm:$0xff]
    %v2217 = vld [vmem:[#allocation6 + $0x18] sm:$0xff]
    %v2218 = vld [vmem:[#allocation6 + $0x20] sm:$0xff]
    %v2219 = vld [vmem:[#allocation6 + $0x28] sm:$0xff]
    %v2220 = vld [vmem:[#allocation6 + $0x30] sm:$0xff]
    %v2221 = vld [vmem:[#allocation6 + $0x38] sm:$0xff]
    %v2222 = vld [vmem:[#allocation6 + $0x40] sm:$0xff]
    %v2223 = vld [vmem:[#allocation6 + $0x48] sm:$0xff]
    %v2224 = vld [vmem:[#allocation6 + $0x50] sm:$0xff]
    %v2225 = vld [vmem:[#allocation6 + $0x58] sm:$0xff]
    %v2226 = vld [vmem:[#allocation6 + $0x60] sm:$0xff]
    %v2227 = vld [vmem:[#allocation6 + $0x68] sm:$0xff]
    %v2228 = vld [vmem:[#allocation6 + $0x70] sm:$0xff]
    %v2229 = vld [vmem:[#allocation6 + $0x78] sm:$0xff]
    %v2230 = vld [vmem:[%s6] sm:$0x3]
    %v2232 = vlaneseq
    %v2233 = vshrl.u32 %v2232, 7
    %v2234 = vsub.s32 0, %v2233
    %v2235 = vrot.slane %v2230, %v2234
    %v2236 = vlaneseq
    %v2237 = vshrl.u32 %v2236, 7
    %v2238 = vsub.s32 1, %v2237
    %v2239 = vrot.slane %v2230, %v2238
    %v2258 = vunpack.c.l.b16 %v2214
    %v2259 = vunpack.c.h.b16 %v2214
    %v2260 = vunpack.c.l.b16 %v2215
    %v2261 = vunpack.c.h.b16 %v2215
    %v2262 = vunpack.c.l.b16 %v2216
    %v2263 = vunpack.c.h.b16 %v2216
    %v2264 = vunpack.c.l.b16 %v2217
    %v2265 = vunpack.c.h.b16 %v2217
    %v2266 = vunpack.c.l.b16 %v2218
    %v2267 = vunpack.c.h.b16 %v2218
    %v2268 = vunpack.c.l.b16 %v2219
    %v2269 = vunpack.c.h.b16 %v2219
    %v2270 = vunpack.c.l.b16 %v2220
    %v2271 = vunpack.c.h.b16 %v2220
    %v2272 = vunpack.c.l.b16 %v2221
    %v2273 = vunpack.c.h.b16 %v2221
    %v2274 = vunpack.c.l.b16 %v2222
    %v2275 = vunpack.c.h.b16 %v2222
    %v2276 = vunpack.c.l.b16 %v2223
    %v2277 = vunpack.c.h.b16 %v2223
    %v2278 = vunpack.c.l.b16 %v2224
    %v2279 = vunpack.c.h.b16 %v2224
    %v2280 = vunpack.c.l.b16 %v2225
    %v2281 = vunpack.c.h.b16 %v2225
    %v2282 = vunpack.c.l.b16 %v2226
    %v2283 = vunpack.c.h.b16 %v2226
    %v2284 = vunpack.c.l.b16 %v2227
    %v2285 = vunpack.c.h.b16 %v2227
    %v2286 = vunpack.c.l.b16 %v2228
    %v2287 = vunpack.c.h.b16 %v2228
    %v2288 = vunpack.c.l.b16 %v2229
    %v2289 = vunpack.c.h.b16 %v2229
    %v2290 = vpack.c.b16 %v2260, %v2258
    %v2291 = vpack.c.b16 %v2261, %v2259
    %v2292 = vpack.c.b16 %v2264, %v2262
    %v2293 = vpack.c.b16 %v2265, %v2263
    %v2294 = vpack.c.b16 %v2268, %v2266
    %v2295 = vpack.c.b16 %v2269, %v2267
    %v2296 = vpack.c.b16 %v2272, %v2270
    %v2297 = vpack.c.b16 %v2273, %v2271
    %v2298 = vpack.c.b16 %v2276, %v2274
    %v2299 = vpack.c.b16 %v2277, %v2275
    %v2300 = vpack.c.b16 %v2280, %v2278
    %v2301 = vpack.c.b16 %v2281, %v2279
    %v2302 = vpack.c.b16 %v2284, %v2282
    %v2303 = vpack.c.b16 %v2285, %v2283
    %v2304 = vpack.c.b16 %v2288, %v2286
    %v2305 = vpack.c.b16 %v2289, %v2287
    %2322 = vmatprep.subr.bf16.mxu0 %v2305
    %2323 = vmatpush1.bf16.msra.mxu0 %v2304
    %2324 = vmatprep.subr.bf16.mxu0 %v2303
    %2325 = vmatpush1.bf16.msra.mxu0 %v2302
    %2326 = vmatprep.subr.bf16.mxu0 %v2301
    %2327 = vmatpush1.bf16.msra.mxu0 %v2300
    %2328 = vmatprep.subr.bf16.mxu0 %v2299
    %2329 = vmatpush1.bf16.msra.mxu0 %v2298
    %2330 = vmatprep.subr.bf16.mxu0 %v2297
    %2331 = vmatpush1.bf16.msra.mxu0 %v2296
    %2332 = vmatprep.subr.bf16.mxu0 %v2295
    %2333 = vmatpush1.bf16.msra.mxu0 %v2294
    %2334 = vmatprep.subr.bf16.mxu0 %v2293
    %2335 = vmatpush1.bf16.msra.mxu0 %v2292
    %2336 = vmatprep.subr.bf16.mxu0 %v2291
    %2337 = vmatpush1.bf16.msra.mxu0 %v2290
    %2338 = vmatprep.subr.bf16.mxu0 0
    %2339 = vmatpush2.bf16.msra.mxu0 0
    %2340 = vmatprep.subr.bf16.mxu0 0
    %2341 = vmatpush2.bf16.msra.mxu0 0
    %2342 = vmatprep.subr.bf16.mxu0 0
    %2343 = vmatpush2.bf16.msra.mxu0 0
    %2344 = vmatprep.subr.bf16.mxu0 0
    %2345 = vmatpush2.bf16.msra.mxu0 0
    %2346 = vmatprep.subr.bf16.mxu0 0
    %2347 = vmatpush2.bf16.msra.mxu0 0
    %2348 = vmatprep.subr.bf16.mxu0 0
    %2349 = vmatpush2.bf16.msra.mxu0 0
    %2350 = vmatprep.subr.bf16.mxu0 0
    %2351 = vmatpush2.bf16.msra.mxu0 0
    %2352 = vmatprep.subr.bf16.mxu0 0
    %2353 = vmatpush2.bf16.msra.mxu0 0
    %2354 = vmatprep.mubr.bf16.mxu0 0
    %2355 = vmatmul.mubr.bf16.gmra.mxu0 %v2213
    %v2356 = vpop.f32.mrf.mxu0
    %v2357 = vadd.f32 %v2235, %v2356
    %v2358 = vpop.f32.mrf.mxu0
    %v2359 = vadd.f32 %v2239, %v2358
    %v2360 = vpop.f32.mrf.mxu0
    %v2361 = vpop.f32.mrf.mxu0
    %2362 = vdwg.mxu0
    %2363 = vst [vmem:[#allocation8] sm:$0xff] %v2357
    %2364 = vst [vmem:[#allocation8 + $0x8] sm:$0xff] %v2359
    // Predicated region
    $region38: #{stacked_lstm_forward.1} parent=1 // pred_check
      _
    $region39: #{stacked_lstm_forward.1} parent=1 // pred_check_branch
      %2366 = sbr.rel (0) target = $region41
    $region40: #{stacked_lstm_forward.1} parent=1 // pred_region
      _
    $region41: #{stacked_lstm_forward.1} parent=1 // pred_fallthru
      _
    // Predicated region
    $region42: #{stacked_lstm_forward.1} parent=1 // pred_check
      _
    $region43: #{stacked_lstm_forward.1} parent=1 // pred_check_branch
      %2368 = sbr.rel (0) target = $region45
    $region44: #{stacked_lstm_forward.1} parent=1 // pred_region
      _
    $region45: #{stacked_lstm_forward.1} parent=1 // pred_fallthru
      _
    // Predicated region
    $region46: #{stacked_lstm_forward.1} parent=1 // pred_check
      _
    $region47: #{stacked_lstm_forward.1} parent=1 // pred_check_branch
      %2370 = sbr.rel (0) target = $region49
    $region48: #{stacked_lstm_forward.1} parent=1 // pred_region
      %s2372 = ssub.s32 256, 256
      %2373 = vsyncadd [#allocation5], %s2372
      %s2375 = sshll.u32 [#allocation8], 4
      %s2376 = int_to_ptr.vmem [resolvable:$true] %s2375
      %2378 = dma.vmem_to_hbm [thread:$0]  %s2376, 256, %s9, [#allocation5]
    $region49: #{stacked_lstm_forward.1} parent=1 // pred_fallthru
      _
    // Predicated region
    $region50: #{stacked_lstm_forward.1} parent=1 // pred_check
      _
    $region51: #{stacked_lstm_forward.1} parent=1 // pred_check_branch
      %2380 = sbr.rel (0) target = $region53
    $region52: #{stacked_lstm_forward.1} parent=1 // pred_region
      _
    $region53: #{stacked_lstm_forward.1} parent=1 // pred_fallthru
      _
    // Predicated region
    $region54: #{stacked_lstm_forward.1} parent=1 // pred_check
      _
    $region55: #{stacked_lstm_forward.1} parent=1 // pred_check_branch
      %2382 = sbr.rel (0) target = $region57
    $region56: #{stacked_lstm_forward.1} parent=1 // pred_region
      _
    $region57: #{stacked_lstm_forward.1} parent=1 // pred_fallthru
      _
    // Predicated region
    $region58: #{stacked_lstm_forward.1} parent=1 // pred_check
      _
    $region59: #{stacked_lstm_forward.1} parent=1 // pred_check_branch
      %2384 = sbr.rel (0) target = $region61
    $region60: #{stacked_lstm_forward.1} parent=1 // pred_region
      %2385 = dma.done [#allocation5], 256
    $region61: #{stacked_lstm_forward.1} parent=1 // pred_fallthru
      _
    %2386 = vsyncpa [#allocation4], 1
    %2387 = vsyncpa [#allocation7], 1
    %2388 = vsyncpa [#allocation5], 1

</llo_original>
